<compile_context>
chip_gen: v5e
topology: v5e:2x2
jax: 0.10.0
libtpu: 0.0.40
codegen_flags: <defaults>
</compile_context>

<pallas_src>
import functools
import math

import jax
import jax.numpy as jnp
from jax import lax
from jax.experimental import pallas as pl
from jax.experimental.pallas import tpu as pltpu


def _attn_skip_ln_kernel(x_q_ref, x_kv_ref, w_qkv_ref, w_o_ref, b_qkv_ref,
                         vecs_ref, o_ref, *, use_skip_connection):
    h = x_q_ref.shape[-1]
    cdt = w_qkv_ref.dtype                          # MXU input dtype (bf16 or f32)
    exact = jnp.dtype(cdt) == jnp.dtype(jnp.float32)

    x_q = x_q_ref[0]                               # (tq, H) f32 — query tile
    x_kv = x_kv_ref[0]                             # (S,  H) f32 — full sequence

    b_qkv = b_qkv_ref[...]                         # (1, 3H) f32
    vecs = vecs_ref[...]                           # (3, H)  f32: [bo; gamma; beta]

    # Q projection from the query tile.  1/sqrt(H) is folded into wq/bq.
    q = jnp.dot(x_q.astype(cdt), w_qkv_ref[:, :h],
                preferred_element_type=jnp.float32) + b_qkv[:, :h]

    # Fused K/V projection: a single (S, H) x (H, 2H) MXU push.
    kv = jnp.dot(x_kv.astype(cdt), w_qkv_ref[:, h:],
                 preferred_element_type=jnp.float32) + b_qkv[:, h:]
    k = kv[:, :h]
    v = kv[:, h:]

    # scores = q @ k^T, expressed as a contraction over both last dims so no
    # transpose is materialized.
    scores = lax.dot_general(
        q.astype(cdt), k.astype(cdt),
        dimension_numbers=(((1,), (1,)), ((), ())),
        preferred_element_type=jnp.float32)        # (tq, S)

    # Numerically-stable softmax over keys (f32 elementwise throughout).
    m = jnp.max(scores, axis=-1, keepdims=True)
    e = jnp.exp(scores - m)
    denom = jnp.sum(e, axis=-1, keepdims=True)
    # approx=True -> EUP vrcp on the bf16 fast path; exact on the f32 path so
    # the tight reference check holds.
    p = e * pl.reciprocal(denom, approx=not exact)

    attn = jnp.dot(p.astype(cdt), v.astype(cdt),
                   preferred_element_type=jnp.float32)          # (tq, H)
    attn_out = jnp.dot(attn.astype(cdt), w_o_ref[...],
                       preferred_element_type=jnp.float32) + vecs[0:1, :]

    # ---- skip connection ----
    ln_in = attn_out + x_q if use_skip_connection else attn_out

    # ---- LayerNorm over hidden dim (eps matches torch.nn.LayerNorm default) ----
    mean = jnp.mean(ln_in, axis=-1, keepdims=True)
    centered = ln_in - mean
    var = jnp.mean(centered * centered, axis=-1, keepdims=True)
    inv_std = lax.rsqrt(var + 1e-5)
    y = centered * inv_std * vecs[1:2, :] + vecs[2:3, :]

    o_ref[0] = y.astype(o_ref.dtype)


def _pack_params(params, hidden, compute_dtype):
    """Fold the 1/sqrt(H) scale into wq/bq and pack the parameters."""
    scale = 1.0 / math.sqrt(hidden)
    w_qkv = jnp.concatenate(
        [params["wq"] * scale, params["wk"], params["wv"]], axis=1)   # (H, 3H)
    b_qkv = jnp.concatenate(
        [params["bq"] * scale, params["bk"], params["bv"]], axis=1)   # (1, 3H)
    vecs = jnp.concatenate(
        [params["bo"], params["gamma"], params["beta"]], axis=0)      # (3, H)
    return (w_qkv.astype(compute_dtype),
            params["wo"].astype(compute_dtype),
            b_qkv.astype(jnp.float32),
            vecs.astype(jnp.float32))


def _vmem_limit_bytes(S, tq, H, w_itemsize):
    f32 = 4
    blocks = 2 * 2 * tq * H * f32                       # x_q + out, double-buffered
    blocks += 2 * S * H * f32                           # x_kv
    blocks += 2 * (3 * H * H + H * H) * w_itemsize      # weights (<=2 buffers)
    blocks += 2 * (3 * H + 3 * H) * f32                 # biases / affine vectors
    interm = (3 * S * H + 3 * tq * S + 6 * tq * H) * f32
    est = 2 * (blocks + interm) + (8 << 20)
    return int(min(max(est, 16 << 20), 64 << 20))       # stay within v7x physical


def _call_kernel(x, packed, *, use_skip_connection, q_tile, weight_buffer_count):
    B, S, H = x.shape
    w_qkv, w_o, b_qkv, vecs = packed

    # Query tile: full sequence if small, else 128-row tiles (sublane-aligned).
    tq = S if S <= q_tile else q_tile
    n_q = pl.cdiv(S, tq)

    if weight_buffer_count is None:
        def const_spec(shape):
            return pl.BlockSpec(shape, lambda b, qi: (0, 0))
    else:
        def const_spec(shape):
            return pl.BlockSpec(shape, lambda b, qi: (0, 0),
                                pipeline_mode=pl.Buffered(weight_buffer_count))

    grid_spec = pltpu.PrefetchScalarGridSpec(
        num_scalar_prefetch=0,
        grid=(B, n_q),
        in_specs=[
            pl.BlockSpec((1, tq, H), lambda b, qi: (b, qi, 0)),  # x (query tile)
            pl.BlockSpec((1, S, H), lambda b, qi: (b, 0, 0)),    # x (full seq, K/V)
            const_spec((H, 3 * H)),                              # [wq*s | wk | wv]
            const_spec((H, H)),                                  # wo
            const_spec((1, 3 * H)),                              # [bq*s | bk | bv]
            const_spec((3, H)),                                  # [bo; gamma; beta]
        ],
        out_specs=pl.BlockSpec((1, tq, H), lambda b, qi: (b, qi, 0)),
    )

    kernel = functools.partial(_attn_skip_ln_kernel,
                               use_skip_connection=use_skip_connection)

    return pl.pallas_call(
        kernel,
        out_shape=jax.ShapeDtypeStruct((B, S, H), x.dtype),
        grid_spec=grid_spec,
        compiler_params=pltpu.CompilerParams(
            dimension_semantics=("parallel", "parallel"),
            vmem_limit_bytes=_vmem_limit_bytes(S, tq, H,
                                               jnp.dtype(w_qkv.dtype).itemsize)),
    )(x, x, w_qkv, w_o, b_qkv, vecs)


def attention_skip_layernorm(x, params, *, use_skip_connection=True,
                             compute_dtype=jnp.bfloat16, q_tile=128):
    """x: (B, S, H) float32.  params: unpacked per-projection weights/biases."""
    _, _, H = x.shape
    packed = _pack_params(params, H, compute_dtype)
    try:
        # Grid-invariant operands single-buffered (halves their VMEM footprint).
        return _call_kernel(x, packed, use_skip_connection=use_skip_connection,
                            q_tile=q_tile, weight_buffer_count=1)
    except Exception:
        # pl.Buffered(1) not accepted by this jax/libtpu combo — fall back to
        # default double-buffering of the invariant operands.
        return _call_kernel(x, packed, use_skip_connection=use_skip_connection,
                            q_tile=q_tile, weight_buffer_count=None)


def _reference(x, params, use_skip_connection=True):
    """Pure-JAX f32 reference of the same forward pass."""
    q = x @ params["wq"] + params["bq"]
    k = x @ params["wk"] + params["bk"]
    v = x @ params["wv"] + params["bv"]
    H = x.shape[-1]
    scores = jnp.einsum("bqd,bkd->bqk", q, k) / jnp.sqrt(jnp.float32(H))
    p = jax.nn.softmax(scores, axis=-1)
    attn = jnp.einsum("bqk,bkd->bqd", p, v)
    attn_out = attn @ params["wo"] + params["bo"]
    ln_in = attn_out + x if use_skip_connection else attn_out
    mean = jnp.mean(ln_in, axis=-1, keepdims=True)
    var = jnp.mean((ln_in - mean) ** 2, axis=-1, keepdims=True)
    return (ln_in - mean) * lax.rsqrt(var + 1e-5) * params["gamma"] + params["beta"]


if __name__ == "__main__":
    B, S, H = 2, 8, 32
    key = jax.random.PRNGKey(0)
    kx, kq, kk, kv, ko = jax.random.split(key, 5)

    x = jax.random.normal(kx, (B, S, H), dtype=jnp.float32)

    w_scale = 1.0 / math.sqrt(H)
    params = {
        "wq": jax.random.normal(kq, (H, H), dtype=jnp.float32) * w_scale,
        "wk": jax.random.normal(kk, (H, H), dtype=jnp.float32) * w_scale,
        "wv": jax.random.normal(kv, (H, H), dtype=jnp.float32) * w_scale,
        "wo": jax.random.normal(ko, (H, H), dtype=jnp.float32) * w_scale,
        "bq": jnp.zeros((1, H), jnp.float32),
        "bk": jnp.zeros((1, H), jnp.float32),
        "bv": jnp.zeros((1, H), jnp.float32),
        "bo": jnp.zeros((1, H), jnp.float32),
        "gamma": jnp.ones((1, H), jnp.float32),   # LayerNorm weight
        "beta": jnp.zeros((1, H), jnp.float32),   # LayerNorm bias
    }

    ref = _reference(x, params)

    # Full-precision path: must match the pure-JAX reference tightly.
    out_f32 = attention_skip_layernorm(x, params, compute_dtype=jnp.float32)
    out_f32 = jax.block_until_ready(out_f32)
    assert out_f32.shape == (B, S, H)
    assert jnp.allclose(out_f32, ref, atol=1e-4, rtol=1e-4)

    # Default fast path: bf16 MXU inputs, f32 accumulation, approx reciprocal.
    out_bf16 = attention_skip_layernorm(x, params)
    out_bf16 = jax.block_until_ready(out_bf16)
    assert out_bf16.shape == (B, S, H)
    assert jnp.allclose(out_bf16, ref, atol=1e-1, rtol=1e-1)

    print("KERNEL_OK")
</pallas_src>

<mosaic_0001>
module attributes {stable_mosaic.version = 11 : i64} {
  func.func @_attn_skip_ln_kernel(%arg0: i32, %arg1: i32, %arg2: memref<1x8x32xf32, #tpu.memory_space<vmem>>, %arg3: memref<1x8x32xf32, #tpu.memory_space<vmem>>, %arg4: memref<32x96xf32, #tpu.memory_space<vmem>>, %arg5: memref<32x32xf32, #tpu.memory_space<vmem>>, %arg6: memref<1x96xf32, #tpu.memory_space<vmem>>, %arg7: memref<3x32xf32, #tpu.memory_space<vmem>>, %arg8: memref<1x8x32xf32, #tpu.memory_space<vmem>>) attributes {dimension_semantics = [#tpu.dimension_semantics<parallel>, #tpu.dimension_semantics<parallel>], iteration_bounds = array<i64: 2, 1>, scalar_prefetch = 0 : i64, scratch_operands = 0 : i64, tpu.core_type = #tpu.core_type<tc>, window_params = [{transform_indices = @transform_0, window_bounds = array<i64: 1, 8, 32>}, {transform_indices = @transform_1, window_bounds = array<i64: 1, 8, 32>}, {pipeline_mode = #tpu.pipeline_mode<synchronous>, transform_indices = @transform_2, window_bounds = array<i64: 32, 96>}, {pipeline_mode = #tpu.pipeline_mode<synchronous>, transform_indices = @transform_3, window_bounds = array<i64: 32, 32>}, {pipeline_mode = #tpu.pipeline_mode<synchronous>, transform_indices = @transform_4, window_bounds = array<i64: 1, 96>}, {pipeline_mode = #tpu.pipeline_mode<synchronous>, transform_indices = @transform_5, window_bounds = array<i64: 3, 32>}, {transform_indices = @transform_6, window_bounds = array<i64: 1, 8, 32>}]} {
    %c0 = arith.constant 0 : index
    %c0_0 = arith.constant 0 : index
    %c0_1 = arith.constant 0 : index
    %0 = vector.load %arg2[%c0, %c0_0, %c0_1] : memref<1x8x32xf32, #tpu.memory_space<vmem>>, vector<1x8x32xf32>
    %1 = vector.shape_cast %0 : vector<1x8x32xf32> to vector<8x32xf32>
    %c0_2 = arith.constant 0 : index
    %c0_3 = arith.constant 0 : index
    %c0_4 = arith.constant 0 : index
    %2 = vector.load %arg3[%c0_2, %c0_3, %c0_4] : memref<1x8x32xf32, #tpu.memory_space<vmem>>, vector<1x8x32xf32>
    %3 = vector.shape_cast %2 : vector<1x8x32xf32> to vector<8x32xf32>
    %c0_5 = arith.constant 0 : index
    %c0_6 = arith.constant 0 : index
    %4 = vector.load %arg6[%c0_5, %c0_6] : memref<1x96xf32, #tpu.memory_space<vmem>>, vector<1x96xf32>
    %c0_7 = arith.constant 0 : index
    %c0_8 = arith.constant 0 : index
    %5 = vector.load %arg7[%c0_7, %c0_8] : memref<3x32xf32, #tpu.memory_space<vmem>>, vector<3x32xf32>
    %c0_9 = arith.constant 0 : index
    %c0_10 = arith.constant 0 : index
    %6 = vector.load %arg4[%c0_9, %c0_10] : memref<32x96xf32, #tpu.memory_space<vmem>>, vector<32x32xf32>
    %cst = arith.constant dense<0.000000e+00> : vector<8x32xf32>
    %7 = tpu.matmul %1, %6, %cst {dimension_numbers = #tpu.dot_dimension_numbers<[1], [0], [0], [1], [0, 0, 1, 1], [], []>} : vector<8x32xf32>, vector<32x32xf32>, vector<8x32xf32> -> vector<8x32xf32>
    %8 = vector.extract_strided_slice %4 {offsets = [0, 0], sizes = [1, 32], strides = [1, 1]} : vector<1x96xf32> to vector<1x32xf32>
    %9 = vector.broadcast %8 : vector<1x32xf32> to vector<8x32xf32>
    %10 = arith.addf %7, %9 : vector<8x32xf32>
    %c0_11 = arith.constant 0 : index
    %c32 = arith.constant 32 : index
    %11 = vector.load %arg4[%c0_11, %c32] : memref<32x96xf32, #tpu.memory_space<vmem>>, vector<32x64xf32>
    %cst_12 = arith.constant dense<0.000000e+00> : vector<8x64xf32>
    %12 = tpu.matmul %3, %11, %cst_12 {dimension_numbers = #tpu.dot_dimension_numbers<[1], [0], [0], [1], [0, 0, 1, 1], [], []>} : vector<8x32xf32>, vector<32x64xf32>, vector<8x64xf32> -> vector<8x64xf32>
    %13 = vector.extract_strided_slice %4 {offsets = [0, 32], sizes = [1, 64], strides = [1, 1]} : vector<1x96xf32> to vector<1x64xf32>
    %14 = vector.broadcast %13 : vector<1x64xf32> to vector<8x64xf32>
    %15 = arith.addf %12, %14 : vector<8x64xf32>
    %16 = vector.extract_strided_slice %15 {offsets = [0, 0], sizes = [8, 32], strides = [1, 1]} : vector<8x64xf32> to vector<8x32xf32>
    %17 = vector.extract_strided_slice %15 {offsets = [0, 32], sizes = [8, 32], strides = [1, 1]} : vector<8x64xf32> to vector<8x32xf32>
    %cst_13 = arith.constant dense<0.000000e+00> : vector<8x8xf32>
    %18 = tpu.matmul %10, %16, %cst_13 {dimension_numbers = #tpu.dot_dimension_numbers<[1], [1], [0], [0], [0, 0, 1, 0], [], []>} : vector<8x32xf32>, vector<8x32xf32>, vector<8x8xf32> -> vector<8x8xf32>
    %cst_14 = arith.constant dense<0xFF800000> : vector<8xf32>
    %19 = vector.multi_reduction <maximumf>, %18, %cst_14 [1] : vector<8x8xf32> to vector<8xf32>
    %20 = vector.shape_cast %19 : vector<8xf32> to vector<8x1xf32>
    %21 = vector.broadcast %20 : vector<8x1xf32> to vector<8x8xf32>
    %22 = arith.subf %18, %21 : vector<8x8xf32>
    %23 = math.exp %22 : vector<8x8xf32>
    %cst_15 = arith.constant dense<0.000000e+00> : vector<8xf32>
    %24 = vector.multi_reduction <add>, %23, %cst_15 [1] : vector<8x8xf32> to vector<8xf32>
    %25 = vector.shape_cast %24 : vector<8xf32> to vector<8x1xf32>
    %26 = tpu.reciprocal %25 : vector<8x1xf32> -> vector<8x1xf32>
    %27 = vector.broadcast %26 : vector<8x1xf32> to vector<8x8xf32>
    %28 = arith.mulf %23, %27 : vector<8x8xf32>
    %cst_16 = arith.constant dense<0.000000e+00> : vector<8x32xf32>
    %29 = tpu.matmul %28, %17, %cst_16 {dimension_numbers = #tpu.dot_dimension_numbers<[1], [0], [0], [1], [0, 0, 1, 1], [], []>} : vector<8x8xf32>, vector<8x32xf32>, vector<8x32xf32> -> vector<8x32xf32>
    %c0_17 = arith.constant 0 : index
    %c0_18 = arith.constant 0 : index
    %30 = vector.load %arg5[%c0_17, %c0_18] : memref<32x32xf32, #tpu.memory_space<vmem>>, vector<32x32xf32>
    %cst_19 = arith.constant dense<0.000000e+00> : vector<8x32xf32>
    %31 = tpu.matmul %29, %30, %cst_19 {dimension_numbers = #tpu.dot_dimension_numbers<[1], [0], [0], [1], [0, 0, 1, 1], [], []>} : vector<8x32xf32>, vector<32x32xf32>, vector<8x32xf32> -> vector<8x32xf32>
    %32 = vector.extract_strided_slice %5 {offsets = [0, 0], sizes = [1, 32], strides = [1, 1]} : vector<3x32xf32> to vector<1x32xf32>
    %33 = vector.broadcast %32 : vector<1x32xf32> to vector<8x32xf32>
    %34 = arith.addf %31, %33 : vector<8x32xf32>
    %35 = arith.addf %34, %1 : vector<8x32xf32>
    %cst_20 = arith.constant dense<0.000000e+00> : vector<8xf32>
    %36 = vector.multi_reduction <add>, %35, %cst_20 [1] : vector<8x32xf32> to vector<8xf32>
    %37 = vector.shape_cast %36 : vector<8xf32> to vector<8x1xf32>
    %cst_21 = arith.constant 3.200000e+01 : f32
    %38 = vector.broadcast %cst_21 : f32 to vector<8x1xf32>
    %39 = arith.divf %37, %38 : vector<8x1xf32>
    %40 = vector.broadcast %39 : vector<8x1xf32> to vector<8x32xf32>
    %41 = arith.subf %35, %40 : vector<8x32xf32>
    %42 = arith.mulf %41, %41 : vector<8x32xf32>
    %cst_22 = arith.constant dense<0.000000e+00> : vector<8xf32>
    %43 = vector.multi_reduction <add>, %42, %cst_22 [1] : vector<8x32xf32> to vector<8xf32>
    %44 = vector.shape_cast %43 : vector<8xf32> to vector<8x1xf32>
    %cst_23 = arith.constant 3.200000e+01 : f32
    %45 = vector.broadcast %cst_23 : f32 to vector<8x1xf32>
    %46 = arith.divf %44, %45 : vector<8x1xf32>
    %cst_24 = arith.constant 9.99999974E-6 : f32
    %47 = vector.broadcast %cst_24 : f32 to vector<8x1xf32>
    %48 = arith.addf %46, %47 : vector<8x1xf32>
    %49 = math.rsqrt %48 : vector<8x1xf32>
    %50 = vector.broadcast %49 : vector<8x1xf32> to vector<8x32xf32>
    %51 = arith.mulf %41, %50 : vector<8x32xf32>
    %52 = vector.extract_strided_slice %5 {offsets = [1, 0], sizes = [1, 32], strides = [1, 1]} : vector<3x32xf32> to vector<1x32xf32>
    %53 = vector.broadcast %52 : vector<1x32xf32> to vector<8x32xf32>
    %54 = arith.mulf %51, %53 : vector<8x32xf32>
    %55 = vector.extract_strided_slice %5 {offsets = [2, 0], sizes = [1, 32], strides = [1, 1]} : vector<3x32xf32> to vector<1x32xf32>
    %56 = vector.broadcast %55 : vector<1x32xf32> to vector<8x32xf32>
    %57 = arith.addf %54, %56 : vector<8x32xf32>
    %c0_25 = arith.constant 0 : index
    %c0_26 = arith.constant 0 : index
    %c0_27 = arith.constant 0 : index
    %58 = vector.load %arg8[%c0_25, %c0_26, %c0_27] : memref<1x8x32xf32, #tpu.memory_space<vmem>>, vector<1x8x32xf32>
    %59 = vector.shape_cast %58 : vector<1x8x32xf32> to vector<8x32xf32>
    %60 = vector.shape_cast %57 : vector<8x32xf32> to vector<1x8x32xf32>
    tpu.vector_store %arg8[%c0_25, %c0_26, %c0_27], %60 {strides = array<i32>} : memref<1x8x32xf32, #tpu.memory_space<vmem>>, vector<1x8x32xf32>,
    return
  }
  func.func @transform_0(%arg0: i32, %arg1: i32) -> (i32, i32, i32) {
    %c0_i32 = arith.constant 0 : i32
    %c0_i32_0 = arith.constant 0 : i32
    return %arg0, %arg1, %c0_i32 : i32, i32, i32
  }
  func.func @transform_1(%arg0: i32, %arg1: i32) -> (i32, i32, i32) {
    %c0_i32 = arith.constant 0 : i32
    %c0_i32_0 = arith.constant 0 : i32
    %c0_i32_1 = arith.constant 0 : i32
    return %arg0, %c0_i32, %c0_i32_0 : i32, i32, i32
  }
  func.func @transform_2(%arg0: i32, %arg1: i32) -> (i32, i32) {
    %c0_i32 = arith.constant 0 : i32
    %c0_i32_0 = arith.constant 0 : i32
    %c0_i32_1 = arith.constant 0 : i32
    return %c0_i32, %c0_i32_0 : i32, i32
  }
  func.func @transform_3(%arg0: i32, %arg1: i32) -> (i32, i32) {
    %c0_i32 = arith.constant 0 : i32
    %c0_i32_0 = arith.constant 0 : i32
    %c0_i32_1 = arith.constant 0 : i32
    return %c0_i32, %c0_i32_0 : i32, i32
  }
  func.func @transform_4(%arg0: i32, %arg1: i32) -> (i32, i32) {
    %c0_i32 = arith.constant 0 : i32
    %c0_i32_0 = arith.constant 0 : i32
    %c0_i32_1 = arith.constant 0 : i32
    return %c0_i32, %c0_i32_0 : i32, i32
  }
  func.func @transform_5(%arg0: i32, %arg1: i32) -> (i32, i32) {
    %c0_i32 = arith.constant 0 : i32
    %c0_i32_0 = arith.constant 0 : i32
    %c0_i32_1 = arith.constant 0 : i32
    return %c0_i32, %c0_i32_0 : i32, i32
  }
  func.func @transform_6(%arg0: i32, %arg1: i32) -> (i32, i32, i32) {
    %c0_i32 = arith.constant 0 : i32
    %c0_i32_0 = arith.constant 0 : i32
    return %arg0, %arg1, %c0_i32 : i32, i32, i32
  }
}

module attributes {stable_mosaic.version = 11 : i64} {
  func.func @_attn_skip_ln_kernel(%arg0: i32, %arg1: i32, %arg2: memref<1x8x32xf32, #tpu.memory_space<vmem>>, %arg3: memref<1x8x32xf32, #tpu.memory_space<vmem>>, %arg4: memref<32x96xf32, #tpu.memory_space<vmem>>, %arg5: memref<32x32xf32, #tpu.memory_space<vmem>>, %arg6: memref<1x96xf32, #tpu.memory_space<vmem>>, %arg7: memref<3x32xf32, #tpu.memory_space<vmem>>, %arg8: memref<1x8x32xf32, #tpu.memory_space<vmem>>) attributes {dimension_semantics = [#tpu.dimension_semantics<parallel>, #tpu.dimension_semantics<parallel>], iteration_bounds = array<i64: 2, 1>, scalar_prefetch = 0 : i64, scratch_operands = 0 : i64, tpu.core_type = #tpu.core_type<tc>, window_params = [{transform_indices = @transform_0, window_bounds = array<i64: 1, 8, 32>}, {transform_indices = @transform_1, window_bounds = array<i64: 1, 8, 32>}, {pipeline_mode = #tpu.pipeline_mode<synchronous>, transform_indices = @transform_2, window_bounds = array<i64: 32, 96>}, {pipeline_mode = #tpu.pipeline_mode<synchronous>, transform_indices = @transform_3, window_bounds = array<i64: 32, 32>}, {pipeline_mode = #tpu.pipeline_mode<synchronous>, transform_indices = @transform_4, window_bounds = array<i64: 1, 96>}, {pipeline_mode = #tpu.pipeline_mode<synchronous>, transform_indices = @transform_5, window_bounds = array<i64: 3, 32>}, {transform_indices = @transform_6, window_bounds = array<i64: 1, 8, 32>}]} {
    %c0 = arith.constant 0 : index
    %c0_0 = arith.constant 0 : index
    %c0_1 = arith.constant 0 : index
    %0 = vector.load %arg2[%c0, %c0_0, %c0_1] : memref<1x8x32xf32, #tpu.memory_space<vmem>>, vector<1x8x32xf32>
    %1 = vector.shape_cast %0 : vector<1x8x32xf32> to vector<8x32xf32>
    %c0_2 = arith.constant 0 : index
    %c0_3 = arith.constant 0 : index
    %c0_4 = arith.constant 0 : index
    %2 = vector.load %arg3[%c0_2, %c0_3, %c0_4] : memref<1x8x32xf32, #tpu.memory_space<vmem>>, vector<1x8x32xf32>
    %3 = vector.shape_cast %2 : vector<1x8x32xf32> to vector<8x32xf32>
    %c0_5 = arith.constant 0 : index
    %c0_6 = arith.constant 0 : index
    %4 = vector.load %arg6[%c0_5, %c0_6] : memref<1x96xf32, #tpu.memory_space<vmem>>, vector<1x96xf32>
    %c0_7 = arith.constant 0 : index
    %c0_8 = arith.constant 0 : index
    %5 = vector.load %arg7[%c0_7, %c0_8] : memref<3x32xf32, #tpu.memory_space<vmem>>, vector<3x32xf32>
    %c0_9 = arith.constant 0 : index
    %c0_10 = arith.constant 0 : index
    %6 = vector.load %arg4[%c0_9, %c0_10] : memref<32x96xf32, #tpu.memory_space<vmem>>, vector<32x32xf32>
    %cst = arith.constant dense<0.000000e+00> : vector<8x32xf32>
    %7 = tpu.matmul %1, %6, %cst {dimension_numbers = #tpu.dot_dimension_numbers<[1], [0], [0], [1], [0, 0, 1, 1], [], []>} : vector<8x32xf32>, vector<32x32xf32>, vector<8x32xf32> -> vector<8x32xf32>
    %8 = vector.extract_strided_slice %4 {offsets = [0, 0], sizes = [1, 32], strides = [1, 1]} : vector<1x96xf32> to vector<1x32xf32>
    %9 = vector.broadcast %8 : vector<1x32xf32> to vector<8x32xf32>
    %10 = arith.addf %7, %9 : vector<8x32xf32>
    %c0_11 = arith.constant 0 : index
    %c32 = arith.constant 32 : index
    %11 = vector.load %arg4[%c0_11, %c32] : memref<32x96xf32, #tpu.memory_space<vmem>>, vector<32x64xf32>
    %cst_12 = arith.constant dense<0.000000e+00> : vector<8x64xf32>
    %12 = tpu.matmul %3, %11, %cst_12 {dimension_numbers = #tpu.dot_dimension_numbers<[1], [0], [0], [1], [0, 0, 1, 1], [], []>} : vector<8x32xf32>, vector<32x64xf32>, vector<8x64xf32> -> vector<8x64xf32>
    %13 = vector.extract_strided_slice %4 {offsets = [0, 32], sizes = [1, 64], strides = [1, 1]} : vector<1x96xf32> to vector<1x64xf32>
    %14 = vector.broadcast %13 : vector<1x64xf32> to vector<8x64xf32>
    %15 = arith.addf %12, %14 : vector<8x64xf32>
    %16 = vector.extract_strided_slice %15 {offsets = [0, 0], sizes = [8, 32], strides = [1, 1]} : vector<8x64xf32> to vector<8x32xf32>
    %17 = vector.extract_strided_slice %15 {offsets = [0, 32], sizes = [8, 32], strides = [1, 1]} : vector<8x64xf32> to vector<8x32xf32>
    %cst_13 = arith.constant dense<0.000000e+00> : vector<8x8xf32>
    %18 = tpu.matmul %10, %16, %cst_13 {dimension_numbers = #tpu.dot_dimension_numbers<[1], [1], [0], [0], [0, 0, 1, 0], [], []>} : vector<8x32xf32>, vector<8x32xf32>, vector<8x8xf32> -> vector<8x8xf32>
    %cst_14 = arith.constant dense<0xFF800000> : vector<8xf32>
    %19 = vector.multi_reduction <maximumf>, %18, %cst_14 [1] : vector<8x8xf32> to vector<8xf32>
    %20 = vector.shape_cast %19 : vector<8xf32> to vector<8x1xf32>
    %21 = vector.broadcast %20 : vector<8x1xf32> to vector<8x8xf32>
    %22 = arith.subf %18, %21 : vector<8x8xf32>
    %23 = math.exp %22 : vector<8x8xf32>
    %cst_15 = arith.constant dense<0.000000e+00> : vector<8xf32>
    %24 = vector.multi_reduction <add>, %23, %cst_15 [1] : vector<8x8xf32> to vector<8xf32>
    %25 = vector.shape_cast %24 : vector<8xf32> to vector<8x1xf32>
    %26 = tpu.reciprocal %25 : vector<8x1xf32> -> vector<8x1xf32>
    %27 = vector.broadcast %26 : vector<8x1xf32> to vector<8x8xf32>
    %28 = arith.mulf %23, %27 : vector<8x8xf32>
    %cst_16 = arith.constant dense<0.000000e+00> : vector<8x32xf32>
    %29 = tpu.matmul %28, %17, %cst_16 {dimension_numbers = #tpu.dot_dimension_numbers<[1], [0], [0], [1], [0, 0, 1, 1], [], []>} : vector<8x8xf32>, vector<8x32xf32>, vector<8x32xf32> -> vector<8x32xf32>
    %c0_17 = arith.constant 0 : index
    %c0_18 = arith.constant 0 : index
    %30 = vector.load %arg5[%c0_17, %c0_18] : memref<32x32xf32, #tpu.memory_space<vmem>>, vector<32x32xf32>
    %cst_19 = arith.constant dense<0.000000e+00> : vector<8x32xf32>
    %31 = tpu.matmul %29, %30, %cst_19 {dimension_numbers = #tpu.dot_dimension_numbers<[1], [0], [0], [1], [0, 0, 1, 1], [], []>} : vector<8x32xf32>, vector<32x32xf32>, vector<8x32xf32> -> vector<8x32xf32>
    %32 = vector.extract_strided_slice %5 {offsets = [0, 0], sizes = [1, 32], strides = [1, 1]} : vector<3x32xf32> to vector<1x32xf32>
    %33 = vector.broadcast %32 : vector<1x32xf32> to vector<8x32xf32>
    %34 = arith.addf %31, %33 : vector<8x32xf32>
    %35 = arith.addf %34, %1 : vector<8x32xf32>
    %cst_20 = arith.constant dense<0.000000e+00> : vector<8xf32>
    %36 = vector.multi_reduction <add>, %35, %cst_20 [1] : vector<8x32xf32> to vector<8xf32>
    %37 = vector.shape_cast %36 : vector<8xf32> to vector<8x1xf32>
    %cst_21 = arith.constant 3.200000e+01 : f32
    %38 = vector.broadcast %cst_21 : f32 to vector<8x1xf32>
    %39 = arith.divf %37, %38 : vector<8x1xf32>
    %40 = vector.broadcast %39 : vector<8x1xf32> to vector<8x32xf32>
    %41 = arith.subf %35, %40 : vector<8x32xf32>
    %42 = arith.mulf %41, %41 : vector<8x32xf32>
    %cst_22 = arith.constant dense<0.000000e+00> : vector<8xf32>
    %43 = vector.multi_reduction <add>, %42, %cst_22 [1] : vector<8x32xf32> to vector<8xf32>
    %44 = vector.shape_cast %43 : vector<8xf32> to vector<8x1xf32>
    %cst_23 = arith.constant 3.200000e+01 : f32
    %45 = vector.broadcast %cst_23 : f32 to vector<8x1xf32>
    %46 = arith.divf %44, %45 : vector<8x1xf32>
    %cst_24 = arith.constant 9.99999974E-6 : f32
    %47 = vector.broadcast %cst_24 : f32 to vector<8x1xf32>
    %48 = arith.addf %46, %47 : vector<8x1xf32>
    %49 = math.rsqrt %48 : vector<8x1xf32>
    %50 = vector.broadcast %49 : vector<8x1xf32> to vector<8x32xf32>
    %51 = arith.mulf %41, %50 : vector<8x32xf32>
    %52 = vector.extract_strided_slice %5 {offsets = [1, 0], sizes = [1, 32], strides = [1, 1]} : vector<3x32xf32> to vector<1x32xf32>
    %53 = vector.broadcast %52 : vector<1x32xf32> to vector<8x32xf32>
    %54 = arith.mulf %51, %53 : vector<8x32xf32>
    %55 = vector.extract_strided_slice %5 {offsets = [2, 0], sizes = [1, 32], strides = [1, 1]} : vector<3x32xf32> to vector<1x32xf32>
    %56 = vector.broadcast %55 : vector<1x32xf32> to vector<8x32xf32>
    %57 = arith.addf %54, %56 : vector<8x32xf32>
    %c0_25 = arith.constant 0 : index
    %c0_26 = arith.constant 0 : index
    %c0_27 = arith.constant 0 : index
    %58 = vector.load %arg8[%c0_25, %c0_26, %c0_27] : memref<1x8x32xf32, #tpu.memory_space<vmem>>, vector<1x8x32xf32>
    %59 = vector.shape_cast %58 : vector<1x8x32xf32> to vector<8x32xf32>
    %60 = vector.shape_cast %57 : vector<8x32xf32> to vector<1x8x32xf32>
    tpu.vector_store %arg8[%c0_25, %c0_26, %c0_27], %60 {strides = array<i32>} : memref<1x8x32xf32, #tpu.memory_space<vmem>>, vector<1x8x32xf32>,
    return
  }
  func.func @transform_0(%arg0: i32, %arg1: i32) -> (i32, i32, i32) {
    %c0_i32 = arith.constant 0 : i32
    %c0_i32_0 = arith.constant 0 : i32
    return %arg0, %arg1, %c0_i32 : i32, i32, i32
  }
  func.func @transform_1(%arg0: i32, %arg1: i32) -> (i32, i32, i32) {
    %c0_i32 = arith.constant 0 : i32
    %c0_i32_0 = arith.constant 0 : i32
    %c0_i32_1 = arith.constant 0 : i32
    return %arg0, %c0_i32, %c0_i32_0 : i32, i32, i32
  }
  func.func @transform_2(%arg0: i32, %arg1: i32) -> (i32, i32) {
    %c0_i32 = arith.constant 0 : i32
    %c0_i32_0 = arith.constant 0 : i32
    %c0_i32_1 = arith.constant 0 : i32
    return %c0_i32, %c0_i32_0 : i32, i32
  }
  func.func @transform_3(%arg0: i32, %arg1: i32) -> (i32, i32) {
    %c0_i32 = arith.constant 0 : i32
    %c0_i32_0 = arith.constant 0 : i32
    %c0_i32_1 = arith.constant 0 : i32
    return %c0_i32, %c0_i32_0 : i32, i32
  }
  func.func @transform_4(%arg0: i32, %arg1: i32) -> (i32, i32) {
    %c0_i32 = arith.constant 0 : i32
    %c0_i32_0 = arith.constant 0 : i32
    %c0_i32_1 = arith.constant 0 : i32
    return %c0_i32, %c0_i32_0 : i32, i32
  }
  func.func @transform_5(%arg0: i32, %arg1: i32) -> (i32, i32) {
    %c0_i32 = arith.constant 0 : i32
    %c0_i32_0 = arith.constant 0 : i32
    %c0_i32_1 = arith.constant 0 : i32
    return %c0_i32, %c0_i32_0 : i32, i32
  }
  func.func @transform_6(%arg0: i32, %arg1: i32) -> (i32, i32, i32) {
    %c0_i32 = arith.constant 0 : i32
    %c0_i32_0 = arith.constant 0 : i32
    return %arg0, %arg1, %c0_i32 : i32, i32, i32
  }
}

</mosaic_0001>

<llo_original>
// kernel: tpu_custom_call.1
$region0: #{tpu_custom_call.1}
  #allocation0 [shape = 'u32[]', space=smem, size = 0x4, offset = 0x4, fixed_abs, tag = 'smem constant byte address 0x4 - core index']
  #allocation1 [shape = 'u32[72,128]{1,0:T(1,128)}', space=vmem, size = 0x9000, scoped, tag = 'internal scratch']
  %s0 = inlined_call_operand.hbm [shape: f32[2,8,32], index: 0, kind: input, shape index: {}]
  %s1 = inlined_call_operand.hbm [shape: f32[2,8,32], index: 1, kind: input, shape index: {}]
  %s2 = inlined_call_operand.hbm [shape: f32[32,96], index: 2, kind: input, shape index: {}]
  %s3 = inlined_call_operand.hbm [shape: f32[32,32], index: 3, kind: input, shape index: {}]
  %s4 = inlined_call_operand.hbm [shape: f32[1,96], index: 4, kind: input, shape index: {}]
  %s5 = inlined_call_operand.vmem [shape: f32[3,32], index: 5, kind: input, shape index: {}]
  %s6 = inlined_call_operand.hbm [shape: f32[2,8,32], index: 6, kind: output, shape index: {}]
  %s7 = sld [smem:[#allocation0]]
  $region77: #{tpu_custom_call.1} parent=0
    _
  %s9 = ssub.s32 1, %s7
  %s10 = scalar_select 0, %s9, %s7
  $region1: #{tpu_custom_call.1} parent=0
    #allocation2 [shape = 'u8[8192]{0}', space=vmem, size = 0x2000, scoped, tag = 'input window, operand 0']
    #allocation3 [shape = 's32[2]{0}', space=sflag, size = 0x8, scoped, tag = 'scoped memory for tpu_custom_call.1']
    #allocation4 [shape = 's32[2]{0}', space=sflag, size = 0x8, scoped, tag = 'scoped memory for tpu_custom_call.1']
    #allocation5 [shape = 'u8[8192]{0}', space=vmem, size = 0x2000, scoped, tag = 'input window, operand 1']
    #allocation6 [shape = 's32[2]{0}', space=sflag, size = 0x8, scoped, tag = 'scoped memory for tpu_custom_call.1']
    #allocation7 [shape = 'u8[16384]{0}', space=vmem, size = 0x4000, scoped, tag = 'input window, operand 2, single buffered']
    #allocation8 [shape = 'u8[16384]{0}', space=vmem, size = 0x4000, scoped, tag = 'input window, operand 3, single buffered']
    #allocation9 [shape = 's32[1]{0}', space=sflag, size = 0x4, scoped, tag = 'scoped memory for tpu_custom_call.1']
    #allocation10 [shape = 'u8[512]{0}', space=vmem, size = 0x400, scoped, tag = 'input window, operand 4, single buffered']
    #allocation11 [shape = 'u8[8192]{0}', space=vmem, size = 0x2000, scoped, tag = 'output window, operand 0']
    %11 = vsyncpa [#allocation3], 0
    %s12 = scalar_lea.sflag [#allocation3], 1
    %13 = vsyncpa %s12, 0
    %14 = vsyncpa [#allocation6], 0
    %s15 = scalar_lea.sflag [#allocation6], 1
    %16 = vsyncpa %s15, 0
    %17 = vsyncpa [#allocation9], 0
    %18 = vsyncpa [#allocation4], 0
    %s19 = scalar_lea.sflag [#allocation4], 1
    %20 = vsyncpa %s19, 0
    loop: start=0, step=1, limit=4
    $region2: #{tpu_custom_call.1} parent=1 // loop_pre_header
      _
    $region3: #{tpu_custom_call.1} parent=1 // loop_header
      %s22 = sphi 0, %s26
      %p23 = scmp.ge.s32.totalorder %s22, 4
      %s29 = sphi 0, %s41
      %s30 = sphi 0, %s37
      %s31 = sphi 0, %s29
      %s32 = sphi 0, %s30
      %s33 = sphi 0, %s31
      %s34 = sphi 0, %s32
      %s46 = sphi 0, %s48
      %s49 = sphi 0, %s46
      %s50 = sphi 0, %s49
      %s66 = sphi 0, %s50
      %s72 = sphi 0, %s74
      %s75 = sphi 0, %s72
      %s76 = sphi 0, %s75
      %s92 = sphi 0, %s76
      %s96 = sphi 0, %s96
      %s98 = sphi 0, %s96
      %s99 = sphi 0, %s98
      %s113 = sphi 0, %s99
      %s117 = sphi 0, %s117
      %s119 = sphi 0, %s117
      %s120 = sphi 0, %s119
      %s134 = sphi 0, %s120
      %s138 = sphi 0, %s138
      %s140 = sphi 0, %s138
      %s141 = sphi 0, %s140
      %s155 = sphi 0, %s141
      %s159 = sphi 0, %s159
      %s161 = sphi 0, %s159
      %s162 = sphi 0, %s161
      %s176 = sphi 0, %s162
      %s184 = sphi 0, %s186
      %s187 = sphi 0, %s184
      %s188 = sphi 0, %s187
      %s204 = sphi 0, %s188
    $region4: #{tpu_custom_call.1} parent=1 // loop_header_branch
      %25 = sbr.rel (%p23) target = $region8
    $region5: #{tpu_custom_call.1} parent=1 // loop_body
      %s27 = ssub.s32 %s22, 1
      %s28 = ssub.s32 %s22, 2
      %s35 = sadd.s32 1, %s30
      %p36 = scmp.ge.s32.totalorder %s35, 1
      %s37 = scalar_select %p36, 0, %s35
      %s38 = sadd.s32 1, %s29
      %s39 = scalar_select %p36, %s38, %s29
      %p40 = scmp.ge.s32.totalorder %s39, 2
      %s41 = scalar_select %p40, 0, %s39
      %s42 = ssub.s32 %s29, %s41
      %s43 = ssub.s32 %s30, %s37
      %s44 = sor.u32 %s42, %s43
      %p45 = scmp.eq.s32.totalorder %s44, 0
      %s47 = sadd.s32 %s46, 1
      %s48 = scalar_select %p45, %s46, %s47
      %p51 = pneg %p45
      %p52 = scmp.eq.s32.totalorder %s22, 1
      %p53 = por %p51, %p52
      %p54 = scmp.ne.s32.totalorder %s46, %s49
      %p55 = scmp.eq.s32.totalorder %s22, 0
      %p56 = por %p54, %p55
      %p57 = scmp.ne.s32.totalorder %s46, %s49
      %p58 = scmp.eq.s32.totalorder %s27, 1
      %p59 = por %p57, %p58
      %p60 = scmp.ne.s32.totalorder %s49, %s50
      %p61 = scmp.eq.s32.totalorder %s27, 0
      %p62 = por %p60, %p61
      %p63 = scmp.ne.s32.totalorder %s49, %s50
      %p64 = scmp.eq.s32.totalorder %s28, 1
      %p65 = por %p63, %p64
      %p67 = scmp.ne.s32.totalorder %s50, %s66
      %p68 = scmp.eq.s32.totalorder %s28, 0
      %p69 = por %p67, %p68
      %s70 = ssub.s32 %s29, %s41
      %p71 = scmp.eq.s32.totalorder %s70, 0
      %s73 = sadd.s32 %s72, 1
      %s74 = scalar_select %p71, %s72, %s73
      %p77 = pneg %p71
      %p78 = scmp.eq.s32.totalorder %s22, 1
      %p79 = por %p77, %p78
      %p80 = scmp.ne.s32.totalorder %s72, %s75
      %p81 = scmp.eq.s32.totalorder %s22, 0
      %p82 = por %p80, %p81
      %p83 = scmp.ne.s32.totalorder %s72, %s75
      %p84 = scmp.eq.s32.totalorder %s27, 1
      %p85 = por %p83, %p84
      %p86 = scmp.ne.s32.totalorder %s75, %s76
      %p87 = scmp.eq.s32.totalorder %s27, 0
      %p88 = por %p86, %p87
      %p89 = scmp.ne.s32.totalorder %s75, %s76
      %p90 = scmp.eq.s32.totalorder %s28, 1
      %p91 = por %p89, %p90
      %p93 = scmp.ne.s32.totalorder %s76, %s92
      %p94 = scmp.eq.s32.totalorder %s28, 0
      %p95 = por %p93, %p94
      %s97 = sadd.s32 %s96, 1
      %p100 = scmp.eq.s32.totalorder %s22, 1
      %p101 = scmp.ne.s32.totalorder %s96, %s98
      %p102 = scmp.eq.s32.totalorder %s22, 0
      %p103 = por %p101, %p102
      %p104 = scmp.ne.s32.totalorder %s96, %s98
      %p105 = scmp.eq.s32.totalorder %s27, 1
      %p106 = por %p104, %p105
      %p107 = scmp.ne.s32.totalorder %s98, %s99
      %p108 = scmp.eq.s32.totalorder %s27, 0
      %p109 = por %p107, %p108
      %p110 = scmp.ne.s32.totalorder %s98, %s99
      %p111 = scmp.eq.s32.totalorder %s28, 1
      %p112 = por %p110, %p111
      %p114 = scmp.ne.s32.totalorder %s99, %s113
      %p115 = scmp.eq.s32.totalorder %s28, 0
      %p116 = por %p114, %p115
      %s118 = sadd.s32 %s117, 1
      %p121 = scmp.eq.s32.totalorder %s22, 1
      %p122 = scmp.ne.s32.totalorder %s117, %s119
      %p123 = scmp.eq.s32.totalorder %s22, 0
      %p124 = por %p122, %p123
      %p125 = scmp.ne.s32.totalorder %s117, %s119
      %p126 = scmp.eq.s32.totalorder %s27, 1
      %p127 = por %p125, %p126
      %p128 = scmp.ne.s32.totalorder %s119, %s120
      %p129 = scmp.eq.s32.totalorder %s27, 0
      %p130 = por %p128, %p129
      %p131 = scmp.ne.s32.totalorder %s119, %s120
      %p132 = scmp.eq.s32.totalorder %s28, 1
      %p133 = por %p131, %p132
      %p135 = scmp.ne.s32.totalorder %s120, %s134
      %p136 = scmp.eq.s32.totalorder %s28, 0
      %p137 = por %p135, %p136
      %s139 = sadd.s32 %s138, 1
      %p142 = scmp.eq.s32.totalorder %s22, 1
      %p143 = scmp.ne.s32.totalorder %s138, %s140
      %p144 = scmp.eq.s32.totalorder %s22, 0
      %p145 = por %p143, %p144
      %p146 = scmp.ne.s32.totalorder %s138, %s140
      %p147 = scmp.eq.s32.totalorder %s27, 1
      %p148 = por %p146, %p147
      %p149 = scmp.ne.s32.totalorder %s140, %s141
      %p150 = scmp.eq.s32.totalorder %s27, 0
      %p151 = por %p149, %p150
      %p152 = scmp.ne.s32.totalorder %s140, %s141
      %p153 = scmp.eq.s32.totalorder %s28, 1
      %p154 = por %p152, %p153
      %p156 = scmp.ne.s32.totalorder %s141, %s155
      %p157 = scmp.eq.s32.totalorder %s28, 0
      %p158 = por %p156, %p157
      %s160 = sadd.s32 %s159, 1
      %p163 = scmp.eq.s32.totalorder %s22, 1
      %p164 = scmp.ne.s32.totalorder %s159, %s161
      %p165 = scmp.eq.s32.totalorder %s22, 0
      %p166 = por %p164, %p165
      %p167 = scmp.ne.s32.totalorder %s159, %s161
      %p168 = scmp.eq.s32.totalorder %s27, 1
      %p169 = por %p167, %p168
      %p170 = scmp.ne.s32.totalorder %s161, %s162
      %p171 = scmp.eq.s32.totalorder %s27, 0
      %p172 = por %p170, %p171
      %p173 = scmp.ne.s32.totalorder %s161, %s162
      %p174 = scmp.eq.s32.totalorder %s28, 1
      %p175 = por %p173, %p174
      %p177 = scmp.ne.s32.totalorder %s162, %s176
      %p178 = scmp.eq.s32.totalorder %s28, 0
      %p179 = por %p177, %p178
      %s180 = ssub.s32 %s29, %s41
      %s181 = ssub.s32 %s30, %s37
      %s182 = sor.u32 %s180, %s181
      %p183 = scmp.eq.s32.totalorder %s182, 0
      %s185 = sadd.s32 %s184, 1
      %s186 = scalar_select %p183, %s184, %s185
      %p189 = pneg %p183
      %p190 = scmp.eq.s32.totalorder %s22, 1
      %p191 = por %p189, %p190
      %p192 = scmp.ne.s32.totalorder %s184, %s187
      %p193 = scmp.eq.s32.totalorder %s22, 0
      %p194 = por %p192, %p193
      %p195 = scmp.ne.s32.totalorder %s184, %s187
      %p196 = scmp.eq.s32.totalorder %s27, 1
      %p197 = por %p195, %p196
      %p198 = scmp.ne.s32.totalorder %s187, %s188
      %p199 = scmp.eq.s32.totalorder %s27, 0
      %p200 = por %p198, %p199
      %p201 = scmp.ne.s32.totalorder %s187, %s188
      %p202 = scmp.eq.s32.totalorder %s28, 1
      %p203 = por %p201, %p202
      %p205 = scmp.ne.s32.totalorder %s188, %s204
      %p206 = scmp.eq.s32.totalorder %s28, 0
      %p207 = por %p205, %p206
      %p208 = scmp.le.s32.totalorder 1, %s22
      %p209 = scmp.lt.s32.totalorder %s22, 3
      %p210 = pnand %p208, %p209
      %p211 = pneg %p210
      // Predicated region
      $region9: #{tpu_custom_call.1} parent=5 // pred_check
        _
      $region10: #{tpu_custom_call.1} parent=5 // pred_check_branch
        %213 = sbr.rel (%p210) target = $region12
      $region11: #{tpu_custom_call.1} parent=5 // pred_region
        %s214 = ssub.s32 %s22, 1
        // Predicated region
        $region13: #{tpu_custom_call.1} parent=11 // pred_check
          %p215 = pneg %p109
        $region14: #{tpu_custom_call.1} parent=11 // pred_check_branch
          %217 = sbr.rel (%p215) target = $region16
        $region15: #{tpu_custom_call.1} parent=11 // pred_region
          %219 = vsyncadd [#allocation6], 0
          %s220 = sshll.u32 %s2, 4
          %s221 = int_to_ptr.hbm [resolvable:$true] %s220
          %s222 = sshll.u32 [#allocation7], 4
          %s223 = int_to_ptr.vmem [resolvable:$true] %s222
          %228 = dma.hbm_to_vmem [thread:$0]  %s221, 512, %s223, [#allocation6], 128, 128, 8
        $region16: #{tpu_custom_call.1} parent=11 // pred_fallthru
          _
        // Predicated region
        $region17: #{tpu_custom_call.1} parent=11 // pred_check
          %p229 = pneg %p130
        $region18: #{tpu_custom_call.1} parent=11 // pred_check_branch
          %231 = sbr.rel (%p229) target = $region20
        $region19: #{tpu_custom_call.1} parent=11 // pred_region
          %233 = vsyncadd [#allocation9], 0
          %s234 = sshll.u32 %s3, 4
          %s235 = int_to_ptr.hbm [resolvable:$true] %s234
          %s236 = sshll.u32 [#allocation8], 4
          %s237 = int_to_ptr.vmem [resolvable:$true] %s236
          %242 = dma.hbm_to_vmem [thread:$0]  %s235, 512, %s237, [#allocation9], 128, 128, 8
        $region20: #{tpu_custom_call.1} parent=11 // pred_fallthru
          _
        // Predicated region
        $region21: #{tpu_custom_call.1} parent=11 // pred_check
          %p243 = pneg %p151
        $region22: #{tpu_custom_call.1} parent=11 // pred_check_branch
          %245 = sbr.rel (%p243) target = $region24
        $region23: #{tpu_custom_call.1} parent=11 // pred_region
          %247 = vsyncadd [#allocation9], 0
          %s249 = sshll.u32 %s4, 4
          %s250 = int_to_ptr.hbm [resolvable:$true] %s249
          %s251 = sshll.u32 [#allocation10], 4
          %s252 = int_to_ptr.vmem [resolvable:$true] %s251
          %254 = dma.hbm_to_vmem [thread:$0]  %s250, 16, %s252, [#allocation9]
        $region24: #{tpu_custom_call.1} parent=11 // pred_fallthru
          _
        // Predicated region
        $region25: #{tpu_custom_call.1} parent=11 // pred_check
          %p255 = pneg %p172
        $region26: #{tpu_custom_call.1} parent=11 // pred_check_branch
          %257 = sbr.rel (%p255) target = $region28
        $region27: #{tpu_custom_call.1} parent=11 // pred_region
          _
        $region28: #{tpu_custom_call.1} parent=11 // pred_fallthru
          _
      $region12: #{tpu_custom_call.1} parent=5 // pred_fallthru
        _
      %p258 = scmp.lt.s32.totalorder %s22, 2
      // Predicated region
      $region29: #{tpu_custom_call.1} parent=5 // pred_check
        %p259 = pneg %p258
      $region30: #{tpu_custom_call.1} parent=5 // pred_check_branch
        %261 = sbr.rel (%p259) target = $region32
      $region31: #{tpu_custom_call.1} parent=5 // pred_region
        // Predicated region
        $region33: #{tpu_custom_call.1} parent=31 // pred_check
          %p262 = pneg %p56
        $region34: #{tpu_custom_call.1} parent=31 // pred_check_branch
          %264 = sbr.rel (%p262) target = $region36
        $region35: #{tpu_custom_call.1} parent=31 // pred_region
          %s265 = sand.u32 %s46, 1
          %s266 = scalar_lea.sflag [#allocation3], %s265
          %s267 = sand.u32 %s46, 1
          %s268 = smul.addr %s267, 8
          %s269 = scalar_lea.vmem [#allocation2], %s268
          %271 = vsyncadd %s266, 0
          %s272 = sadd.s32 %s30, %s29
          %s273 = smul.addr %s272, 8
          %s274 = scalar_lea.hbm %s0, %s273
          %s276 = sshll.u32 %s274, 4
          %s277 = int_to_ptr.hbm [resolvable:$true] %s276
          %s278 = sshll.u32 %s269, 4
          %s279 = int_to_ptr.vmem [resolvable:$true] %s278
          %281 = dma.hbm_to_vmem [thread:$0]  %s277, 128, %s279, %s266
        $region36: #{tpu_custom_call.1} parent=31 // pred_fallthru
          _
        // Predicated region
        $region37: #{tpu_custom_call.1} parent=31 // pred_check
          %p282 = pneg %p82
        $region38: #{tpu_custom_call.1} parent=31 // pred_check_branch
          %284 = sbr.rel (%p282) target = $region40
        $region39: #{tpu_custom_call.1} parent=31 // pred_region
          %s285 = sand.u32 %s22, 1
          %s286 = scalar_lea.sflag [#allocation6], %s285
          %s287 = sand.u32 %s72, 1
          %s288 = smul.addr %s287, 8
          %s289 = scalar_lea.vmem [#allocation5], %s288
          %291 = vsyncadd %s286, 0
          %s292 = smul.addr %s29, 8
          %s293 = scalar_lea.hbm %s1, %s292
          %s295 = sshll.u32 %s293, 4
          %s296 = int_to_ptr.hbm [resolvable:$true] %s295
          %s297 = sshll.u32 %s289, 4
          %s298 = int_to_ptr.vmem [resolvable:$true] %s297
          %300 = dma.hbm_to_vmem [thread:$0]  %s296, 128, %s298, %s286
        $region40: #{tpu_custom_call.1} parent=31 // pred_fallthru
          _
      $region32: #{tpu_custom_call.1} parent=5 // pred_fallthru
        _
      %p301 = scmp.le.s32.totalorder 1, %s22
      %p302 = scmp.lt.s32.totalorder %s22, 3
      %p303 = pnand %p301, %p302
      %p304 = pneg %p303
      // Predicated region
      $region41: #{tpu_custom_call.1} parent=5 // pred_check
        _
      $region42: #{tpu_custom_call.1} parent=5 // pred_check_branch
        %306 = sbr.rel (%p303) target = $region44
      $region43: #{tpu_custom_call.1} parent=5 // pred_region
        %s307 = ssub.s32 %s22, 1
        %s308 = sand.u32 %s49, 1
        %s309 = scalar_lea.sflag [#allocation3], %s308
        %s310 = sand.u32 %s49, 1
        %s311 = smul.addr %s310, 8
        %s312 = scalar_lea.vmem [#allocation2], %s311
        // Predicated region
        $region45: #{tpu_custom_call.1} parent=43 // pred_check
          %p313 = pneg %p62
        $region46: #{tpu_custom_call.1} parent=43 // pred_check_branch
          %315 = sbr.rel (%p313) target = $region48
        $region47: #{tpu_custom_call.1} parent=43 // pred_region
          %317 = dma.done %s309, 128
        $region48: #{tpu_custom_call.1} parent=43 // pred_fallthru
          _
        %s318 = sand.u32 %s27, 1
        %s319 = scalar_lea.sflag [#allocation6], %s318
        %s320 = sand.u32 %s75, 1
        %s321 = smul.addr %s320, 8
        %s322 = scalar_lea.vmem [#allocation5], %s321
        // Predicated region
        $region49: #{tpu_custom_call.1} parent=43 // pred_check
          %p323 = pneg %p88
        $region50: #{tpu_custom_call.1} parent=43 // pred_check_branch
          %325 = sbr.rel (%p323) target = $region52
        $region51: #{tpu_custom_call.1} parent=43 // pred_region
          %327 = dma.done %s319, 128
        $region52: #{tpu_custom_call.1} parent=43 // pred_fallthru
          _
        // Predicated region
        $region53: #{tpu_custom_call.1} parent=43 // pred_check
          %p328 = pneg %p109
        $region54: #{tpu_custom_call.1} parent=43 // pred_check_branch
          %330 = sbr.rel (%p328) target = $region56
        $region55: #{tpu_custom_call.1} parent=43 // pred_region
          %332 = dma.done [#allocation6], 512
        $region56: #{tpu_custom_call.1} parent=43 // pred_fallthru
          _
        // Predicated region
        $region57: #{tpu_custom_call.1} parent=43 // pred_check
          %p333 = pneg %p130
        $region58: #{tpu_custom_call.1} parent=43 // pred_check_branch
          %335 = sbr.rel (%p333) target = $region60
        $region59: #{tpu_custom_call.1} parent=43 // pred_region
          %337 = dma.done [#allocation9], 512
        $region60: #{tpu_custom_call.1} parent=43 // pred_fallthru
          _
        // Predicated region
        $region61: #{tpu_custom_call.1} parent=43 // pred_check
          %p338 = pneg %p151
        $region62: #{tpu_custom_call.1} parent=43 // pred_check_branch
          %340 = sbr.rel (%p338) target = $region64
        $region63: #{tpu_custom_call.1} parent=43 // pred_region
          %342 = dma.done [#allocation9], 16
        $region64: #{tpu_custom_call.1} parent=43 // pred_fallthru
          _
        %s343 = sand.u32 %s49, 1
        %s344 = scalar_lea.sflag [#allocation3], %s343
        %s345 = sand.u32 %s49, 1
        %s346 = smul.addr %s345, 8
        %s347 = scalar_lea.vmem [#allocation2], %s346
        %p348 = pneg %p62
        %p349 = pneg %p59
        %s350 = sand.u32 %s27, 1
        %s351 = scalar_lea.sflag [#allocation6], %s350
        %s352 = sand.u32 %s75, 1
        %s353 = smul.addr %s352, 8
        %s354 = scalar_lea.vmem [#allocation5], %s353
        %p355 = pneg %p88
        %p356 = pneg %p85
        %p357 = pneg %p109
        %p358 = pneg %p106
        %p359 = pneg %p130
        %p360 = pneg %p127
        %p361 = pneg %p151
        %p362 = pneg %p148
        %p363 = pneg %p172
        %p364 = pneg %p169
        %p365 = pneg %p200
        %p366 = pneg %p197
        %s367 = sand.u32 %s187, 1
        %s368 = scalar_lea.sflag [#allocation4], %s367
        %s369 = sand.u32 %s187, 1
        %s370 = smul.addr %s369, 8
        %s371 = scalar_lea.vmem [#allocation11], %s370
        %v372 = vld [vmem:[%s312] sm:$0xff]
        %v373 = vld [vmem:[%s322] sm:$0xff]
        %v374 = vld [vmem:[#allocation10] sm:$0x1]
        %v375 = vld [vmem:[%s5] sm:$0x7]
        %v376 = vld [vmem:[#allocation7] sm:$0xff]
        %v377 = vld [vmem:[#allocation7 + $0x8] sm:$0xff]
        %v378 = vld [vmem:[#allocation7 + $0x10] sm:$0xff]
        %v379 = vld [vmem:[#allocation7 + $0x18] sm:$0xff]
        %v381 = vperm.slane %v374, 0
        %vm383 = vcmask 261120
        %v385 = vsel %vm383, %v372, 0
        %387 = vmatpush.msra.mxu0 0.0
        %388 = vmatpush.msra.mxu0 0.0
        %389 = vmatpush.msra.mxu0 0.0
        %390 = vmatpush.msra.mxu0 0.0
        %391 = vmatpush.msra.mxu0 0.0
        %392 = vmatpush.msra.mxu0 0.0
        %393 = vmatpush.msra.mxu0 0.0
        %394 = vmatpush.msra.mxu0 0.0
        %395 = vmatpush.msra.mxu0 0.0
        %396 = vmatpush.msra.mxu0 0.0
        %397 = vmatpush.msra.mxu0 0.0
        %398 = vmatpush.msra.mxu0 0.0
        %399 = vmatpush.msra.mxu0 %v379
        %400 = vmatpush.msra.mxu0 %v378
        %401 = vmatpush.msra.mxu0 %v377
        %402 = vmatpush.msra.mxu0 %v376
        %403 = vmatmul.f32.gmra.mxu0 %v385
        %v404 = vpop.f32.mrf.mxu0
        %v405 = vadd.f32 %v381, %v404
        %406 = vdwg.mxu0
        %411 = vrot.lane.b32.xlu0 %v376, 96
        %v412 = vpop.permute.xlu0 %411
        %413 = vrot.lane.b32.xlu0 %v377, 96
        %v414 = vpop.permute.xlu0 %413
        %415 = vrot.lane.b32.xlu0 %v378, 96
        %v416 = vpop.permute.xlu0 %415
        %417 = vrot.lane.b32.xlu0 %v379, 96
        %v418 = vpop.permute.xlu0 %417
        %423 = vrot.lane.b32.xlu0 %v381, 96
        %v424 = vpop.permute.xlu0 %423
        %v427 = vsel %vm383, %v373, 0
        %429 = vmatpush.msra.mxu0 0.0
        %430 = vmatpush.msra.mxu0 0.0
        %431 = vmatpush.msra.mxu0 0.0
        %432 = vmatpush.msra.mxu0 0.0
        %433 = vmatpush.msra.mxu0 0.0
        %434 = vmatpush.msra.mxu0 0.0
        %435 = vmatpush.msra.mxu0 0.0
        %436 = vmatpush.msra.mxu0 0.0
        %437 = vmatpush.msra.mxu0 0.0
        %438 = vmatpush.msra.mxu0 0.0
        %439 = vmatpush.msra.mxu0 0.0
        %440 = vmatpush.msra.mxu0 0.0
        %441 = vmatpush.msra.mxu0 %v418
        %442 = vmatpush.msra.mxu0 %v416
        %443 = vmatpush.msra.mxu0 %v414
        %444 = vmatpush.msra.mxu0 %v412
        %445 = vmatmul.f32.gmra.mxu0 %v427
        %v446 = vpop.f32.mrf.mxu0
        %v447 = vadd.f32 %v424, %v446
        %448 = vdwg.mxu0
        %v450 = vsel %vm383, %v405, 0
        %v453 = vsel %vm383, %v447, 0
        %455 = vmatpush.xpose.msra.mxu0 0.0
        %456 = vmatpush.xpose.msra.mxu0 0.0
        %457 = vmatpush.xpose.msra.mxu0 0.0
        %458 = vmatpush.xpose.msra.mxu0 0.0
        %459 = vmatpush.xpose.msra.mxu0 0.0
        %460 = vmatpush.xpose.msra.mxu0 0.0
        %461 = vmatpush.xpose.msra.mxu0 0.0
        %462 = vmatpush.xpose.msra.mxu0 0.0
        %463 = vmatpush.xpose.msra.mxu0 0.0
        %464 = vmatpush.xpose.msra.mxu0 0.0
        %465 = vmatpush.xpose.msra.mxu0 0.0
        %466 = vmatpush.xpose.msra.mxu0 0.0
        %467 = vmatpush.xpose.msra.mxu0 0.0
        %468 = vmatpush.xpose.msra.mxu0 0.0
        %469 = vmatpush.xpose.msra.mxu0 0.0
        %470 = vmatpush.xpose.msra.mxu0 %v453
        %471 = vmatmul.f32.gmra.mxu0 %v450
        %v472 = vpop.f32.mrf.mxu0
        %v473 = vadd.f32 0.0, %v472
        %474 = vdwg.mxu0
        %vm475 = vcmask 64512
        %v476 = vsel %vm475, %v473, -inf
        %477 = vmax.xlane.f32.xlu0 %v476
        %v478 = vpop.xlane.xlu0 %477
        %v479 = vsub.f32 %v473, %v478
        %v480 = vmul.f32 %v479, 1.442695
        %v481 = vpow.pop %v480
        %v482 = vsel %vm475, %v481, 0.0
        %483 = vadd.xlane.f32.xlu0 %v482
        %v484 = vpop.xlane.xlu0 %483
        %v485 = vrcp.pop %v484
        %v486 = vmul.f32 %v484, %v485
        %v487 = vsub.f32 1.0, %v486
        %v488 = vmul.f32 %v485, %v487
        %v489 = vadd.f32 %v485, %v488
        %vm490 = vweird.f32 %v484
        %vm491 = vweird.f32 %v485
        %vm492 = vmor %vm490, %vm491
        %v493 = vsel %vm492, %v485, %v489
        %v494 = vand.u32 2147483647, %v484
        %vm495 = vcmp.eq.f32.partialorder %v494, 8.507059e+37
        %v496 = vand.u32 %v484, 2147483648
        %v497 = vor.u32 1.1754944e-38, %v496
        %v498 = vsel %vm495, %v497, %v493
        %v499 = vmul.f32 %v481, %v498
        %500 = vrot.lane.b32.xlu0 %v447, 96
        %v501 = vpop.permute.xlu0 %500
        %v504 = vsel %vm475, %v499, 0
        %506 = vmatpush.msra.mxu0 0.0
        %507 = vmatpush.msra.mxu0 0.0
        %508 = vmatpush.msra.mxu0 0.0
        %509 = vmatpush.msra.mxu0 0.0
        %510 = vmatpush.msra.mxu0 0.0
        %511 = vmatpush.msra.mxu0 0.0
        %512 = vmatpush.msra.mxu0 0.0
        %513 = vmatpush.msra.mxu0 0.0
        %514 = vmatpush.msra.mxu0 0.0
        %515 = vmatpush.msra.mxu0 0.0
        %516 = vmatpush.msra.mxu0 0.0
        %517 = vmatpush.msra.mxu0 0.0
        %518 = vmatpush.msra.mxu0 0.0
        %519 = vmatpush.msra.mxu0 0.0
        %520 = vmatpush.msra.mxu0 0.0
        %521 = vmatpush.msra.mxu0 %v501
        %522 = vmatmul.f32.gmra.mxu0 %v504
        %v523 = vpop.f32.mrf.mxu0
        %v524 = vadd.f32 0.0, %v523
        %525 = vdwg.mxu0
        %v526 = vld [vmem:[#allocation8] sm:$0xff]
        %v527 = vld [vmem:[#allocation8 + $0x8] sm:$0xff]
        %v528 = vld [vmem:[#allocation8 + $0x10] sm:$0xff]
        %v529 = vld [vmem:[#allocation8 + $0x18] sm:$0xff]
        %v530 = vperm.slane %v375, 0
        %v532 = vsel %vm383, %v524, 0
        %534 = vmatpush.msra.mxu0 0.0
        %535 = vmatpush.msra.mxu0 0.0
        %536 = vmatpush.msra.mxu0 0.0
        %537 = vmatpush.msra.mxu0 0.0
        %538 = vmatpush.msra.mxu0 0.0
        %539 = vmatpush.msra.mxu0 0.0
        %540 = vmatpush.msra.mxu0 0.0
        %541 = vmatpush.msra.mxu0 0.0
        %542 = vmatpush.msra.mxu0 0.0
        %543 = vmatpush.msra.mxu0 0.0
        %544 = vmatpush.msra.mxu0 0.0
        %545 = vmatpush.msra.mxu0 0.0
        %546 = vmatpush.msra.mxu0 %v529
        %547 = vmatpush.msra.mxu0 %v528
        %548 = vmatpush.msra.mxu0 %v527
        %549 = vmatpush.msra.mxu0 %v526
        %550 = vmatmul.f32.gmra.mxu0 %v532
        %v551 = vpop.f32.mrf.mxu0
        %v552 = vadd.f32 %v530, %v551
        %553 = vdwg.mxu0
        %v554 = vadd.f32 %v552, %v372
        %v555 = vsel %vm383, %v554, 0.0
        %556 = vadd.xlane.f32.xlu0 %v555
        %v557 = vpop.xlane.xlu0 %556
        %v558 = vrcp.pop 32.0
        %v559 = vmul.f32 32.0, %v558
        %v560 = vsub.f32 1.0, %v559
        %v561 = vmul.f32 %v558, %v560
        %v562 = vadd.f32 %v558, %v561
        %vm563 = vweird.f32 %v558
        %v564 = vsel %vm563, %v558, %v562
        %v565 = vmul.f32 %v557, %v564
        %v566 = vsub.f32 %v554, %v565
        %v567 = vmul.f32 %v566, %v566
        %v568 = vsel %vm383, %v567, 0.0
        %569 = vadd.xlane.f32.xlu0 %v568
        %v570 = vpop.xlane.xlu0 %569
        %v571 = vmul.f32 %v570, %v564
        %v572 = vadd.f32 %v571, 1e-05
        %v573 = vrsqrt.pop %v572
        %v574 = vmul.f32 %v573, %v572
        %v575 = vmul.f32 %v574, %v573
        %v576 = vmul.f32 0.5, %v575
        %v577 = vsub.f32 1.5, %v576
        %v578 = vmul.f32 %v573, %v577
        %vm579 = vweird.f32 %v572
        %vm580 = vweird.f32 %v573
        %vm581 = vmor %vm579, %vm580
        %v582 = vsel %vm581, %v573, %v578
        %v583 = vmul.f32 %v566, %v582
        %v584 = vperm.slane %v375, 1
        %v585 = vmul.f32 %v583, %v584
        %v586 = vperm.slane %v375, 2
        %v587 = vadd.f32 %v585, %v586
        %588 = vst.msk [vmem:[%s371] sm:$0xff] %vm383, %v587
        %s589 = sand.u32 %s187, 1
        %s590 = scalar_lea.sflag [#allocation4], %s589
        %s591 = sand.u32 %s187, 1
        %s592 = smul.addr %s591, 8
        %s593 = scalar_lea.vmem [#allocation11], %s592
        // Predicated region
        $region65: #{tpu_custom_call.1} parent=43 // pred_check
          %p594 = pneg %p197
        $region66: #{tpu_custom_call.1} parent=43 // pred_check_branch
          %596 = sbr.rel (%p594) target = $region68
        $region67: #{tpu_custom_call.1} parent=43 // pred_region
          %598 = vsyncadd %s590, 0
          %s599 = sadd.s32 %s32, %s31
          %s600 = smul.addr %s599, 8
          %s601 = scalar_lea.hbm %s6, %s600
          %s603 = sshll.u32 %s593, 4
          %s604 = int_to_ptr.vmem [resolvable:$true] %s603
          %s605 = sshll.u32 %s601, 4
          %s606 = int_to_ptr.hbm [resolvable:$true] %s605
          %608 = dma.vmem_to_hbm [thread:$0]  %s604, 128, %s606, %s590
        $region68: #{tpu_custom_call.1} parent=43 // pred_fallthru
          _
      $region44: #{tpu_custom_call.1} parent=5 // pred_fallthru
        _
      %p609 = scmp.le.s32.totalorder 2, %s22
      // Predicated region
      $region69: #{tpu_custom_call.1} parent=5 // pred_check
        %p610 = pneg %p609
      $region70: #{tpu_custom_call.1} parent=5 // pred_check_branch
        %612 = sbr.rel (%p610) target = $region72
      $region71: #{tpu_custom_call.1} parent=5 // pred_region
        %s613 = ssub.s32 %s22, 2
        // Predicated region
        $region73: #{tpu_custom_call.1} parent=71 // pred_check
          %p614 = pneg %p203
        $region74: #{tpu_custom_call.1} parent=71 // pred_check_branch
          %616 = sbr.rel (%p614) target = $region76
        $region75: #{tpu_custom_call.1} parent=71 // pred_region
          %s617 = sand.u32 %s188, 1
          %s618 = scalar_lea.sflag [#allocation4], %s617
          %s619 = sand.u32 %s188, 1
          %s620 = smul.addr %s619, 8
          %s621 = scalar_lea.vmem [#allocation11], %s620
          %623 = dma.done %s618, 128
        $region76: #{tpu_custom_call.1} parent=71 // pred_fallthru
          _
      $region72: #{tpu_custom_call.1} parent=5 // pred_fallthru
        _
    $region6: #{tpu_custom_call.1} parent=1 // loop_footer
      %s26 = sadd.s32 1, %s22
    $region7: #{tpu_custom_call.1} parent=1 // loop_footer_branch
      %21 = sbr.rel target = $region3
    $region8: #{tpu_custom_call.1} parent=1 // loop_exit
      _
    %624 = vsyncpa [#allocation3], 1
    %s625 = scalar_lea.sflag [#allocation3], 1
    %626 = vsyncpa %s625, 1
    %627 = vsyncpa [#allocation6], 1
    %s628 = scalar_lea.sflag [#allocation6], 1
    %629 = vsyncpa %s628, 1
    %630 = vsyncpa [#allocation9], 1
    %631 = vsyncpa [#allocation4], 1
    %s632 = scalar_lea.sflag [#allocation4], 1
    %633 = vsyncpa %s632, 1

// kernel: tpu_custom_call.1
$region0: #{tpu_custom_call.1}
  #allocation0 [shape = 'u32[]', space=smem, size = 0x4, offset = 0x4, fixed_abs, tag = 'smem constant byte address 0x4 - core index']
  #allocation1 [shape = 'u32[72,128]{1,0:T(1,128)}', space=vmem, size = 0x9000, scoped, tag = 'internal scratch']
  %s0 = inlined_call_operand.hbm [shape: f32[2,8,32], index: 0, kind: input, shape index: {}]
  %s1 = inlined_call_operand.hbm [shape: f32[2,8,32], index: 1, kind: input, shape index: {}]
  %s2 = inlined_call_operand.hbm [shape: f32[32,96], index: 2, kind: input, shape index: {}]
  %s3 = inlined_call_operand.hbm [shape: f32[32,32], index: 3, kind: input, shape index: {}]
  %s4 = inlined_call_operand.hbm [shape: f32[1,96], index: 4, kind: input, shape index: {}]
  %s5 = inlined_call_operand.vmem [shape: f32[3,32], index: 5, kind: input, shape index: {}]
  %s6 = inlined_call_operand.hbm [shape: f32[2,8,32], index: 6, kind: output, shape index: {}]
  %s7 = sld [smem:[#allocation0]]
  $region77: #{tpu_custom_call.1} parent=0
    _
  %s9 = ssub.s32 1, %s7
  %s10 = scalar_select 0, %s9, %s7
  $region1: #{tpu_custom_call.1} parent=0
    #allocation2 [shape = 'u8[8192]{0}', space=vmem, size = 0x2000, scoped, tag = 'input window, operand 0']
    #allocation3 [shape = 's32[2]{0}', space=sflag, size = 0x8, scoped, tag = 'scoped memory for tpu_custom_call.1']
    #allocation4 [shape = 's32[2]{0}', space=sflag, size = 0x8, scoped, tag = 'scoped memory for tpu_custom_call.1']
    #allocation5 [shape = 'u8[8192]{0}', space=vmem, size = 0x2000, scoped, tag = 'input window, operand 1']
    #allocation6 [shape = 's32[2]{0}', space=sflag, size = 0x8, scoped, tag = 'scoped memory for tpu_custom_call.1']
    #allocation7 [shape = 'u8[16384]{0}', space=vmem, size = 0x4000, scoped, tag = 'input window, operand 2, single buffered']
    #allocation8 [shape = 'u8[16384]{0}', space=vmem, size = 0x4000, scoped, tag = 'input window, operand 3, single buffered']
    #allocation9 [shape = 's32[1]{0}', space=sflag, size = 0x4, scoped, tag = 'scoped memory for tpu_custom_call.1']
    #allocation10 [shape = 'u8[512]{0}', space=vmem, size = 0x400, scoped, tag = 'input window, operand 4, single buffered']
    #allocation11 [shape = 'u8[8192]{0}', space=vmem, size = 0x2000, scoped, tag = 'output window, operand 0']
    %11 = vsyncpa [#allocation3], 0
    %s12 = scalar_lea.sflag [#allocation3], 1
    %13 = vsyncpa %s12, 0
    %14 = vsyncpa [#allocation6], 0
    %s15 = scalar_lea.sflag [#allocation6], 1
    %16 = vsyncpa %s15, 0
    %17 = vsyncpa [#allocation9], 0
    %18 = vsyncpa [#allocation4], 0
    %s19 = scalar_lea.sflag [#allocation4], 1
    %20 = vsyncpa %s19, 0
    loop: start=0, step=1, limit=4
    $region2: #{tpu_custom_call.1} parent=1 // loop_pre_header
      _
    $region3: #{tpu_custom_call.1} parent=1 // loop_header
      %s22 = sphi 0, %s26
      %p23 = scmp.ge.s32.totalorder %s22, 4
      %s29 = sphi 0, %s41
      %s30 = sphi 0, %s37
      %s31 = sphi 0, %s29
      %s32 = sphi 0, %s30
      %s33 = sphi 0, %s31
      %s34 = sphi 0, %s32
      %s46 = sphi 0, %s48
      %s49 = sphi 0, %s46
      %s50 = sphi 0, %s49
      %s66 = sphi 0, %s50
      %s72 = sphi 0, %s74
      %s75 = sphi 0, %s72
      %s76 = sphi 0, %s75
      %s92 = sphi 0, %s76
      %s96 = sphi 0, %s96
      %s98 = sphi 0, %s96
      %s99 = sphi 0, %s98
      %s113 = sphi 0, %s99
      %s117 = sphi 0, %s117
      %s119 = sphi 0, %s117
      %s120 = sphi 0, %s119
      %s134 = sphi 0, %s120
      %s138 = sphi 0, %s138
      %s140 = sphi 0, %s138
      %s141 = sphi 0, %s140
      %s155 = sphi 0, %s141
      %s159 = sphi 0, %s159
      %s161 = sphi 0, %s159
      %s162 = sphi 0, %s161
      %s176 = sphi 0, %s162
      %s184 = sphi 0, %s186
      %s187 = sphi 0, %s184
      %s188 = sphi 0, %s187
      %s204 = sphi 0, %s188
    $region4: #{tpu_custom_call.1} parent=1 // loop_header_branch
      %25 = sbr.rel (%p23) target = $region8
    $region5: #{tpu_custom_call.1} parent=1 // loop_body
      %s27 = ssub.s32 %s22, 1
      %s28 = ssub.s32 %s22, 2
      %s35 = sadd.s32 1, %s30
      %p36 = scmp.ge.s32.totalorder %s35, 1
      %s37 = scalar_select %p36, 0, %s35
      %s38 = sadd.s32 1, %s29
      %s39 = scalar_select %p36, %s38, %s29
      %p40 = scmp.ge.s32.totalorder %s39, 2
      %s41 = scalar_select %p40, 0, %s39
      %s42 = ssub.s32 %s29, %s41
      %s43 = ssub.s32 %s30, %s37
      %s44 = sor.u32 %s42, %s43
      %p45 = scmp.eq.s32.totalorder %s44, 0
      %s47 = sadd.s32 %s46, 1
      %s48 = scalar_select %p45, %s46, %s47
      %p51 = pneg %p45
      %p52 = scmp.eq.s32.totalorder %s22, 1
      %p53 = por %p51, %p52
      %p54 = scmp.ne.s32.totalorder %s46, %s49
      %p55 = scmp.eq.s32.totalorder %s22, 0
      %p56 = por %p54, %p55
      %p57 = scmp.ne.s32.totalorder %s46, %s49
      %p58 = scmp.eq.s32.totalorder %s27, 1
      %p59 = por %p57, %p58
      %p60 = scmp.ne.s32.totalorder %s49, %s50
      %p61 = scmp.eq.s32.totalorder %s27, 0
      %p62 = por %p60, %p61
      %p63 = scmp.ne.s32.totalorder %s49, %s50
      %p64 = scmp.eq.s32.totalorder %s28, 1
      %p65 = por %p63, %p64
      %p67 = scmp.ne.s32.totalorder %s50, %s66
      %p68 = scmp.eq.s32.totalorder %s28, 0
      %p69 = por %p67, %p68
      %s70 = ssub.s32 %s29, %s41
      %p71 = scmp.eq.s32.totalorder %s70, 0
      %s73 = sadd.s32 %s72, 1
      %s74 = scalar_select %p71, %s72, %s73
      %p77 = pneg %p71
      %p78 = scmp.eq.s32.totalorder %s22, 1
      %p79 = por %p77, %p78
      %p80 = scmp.ne.s32.totalorder %s72, %s75
      %p81 = scmp.eq.s32.totalorder %s22, 0
      %p82 = por %p80, %p81
      %p83 = scmp.ne.s32.totalorder %s72, %s75
      %p84 = scmp.eq.s32.totalorder %s27, 1
      %p85 = por %p83, %p84
      %p86 = scmp.ne.s32.totalorder %s75, %s76
      %p87 = scmp.eq.s32.totalorder %s27, 0
      %p88 = por %p86, %p87
      %p89 = scmp.ne.s32.totalorder %s75, %s76
      %p90 = scmp.eq.s32.totalorder %s28, 1
      %p91 = por %p89, %p90
      %p93 = scmp.ne.s32.totalorder %s76, %s92
      %p94 = scmp.eq.s32.totalorder %s28, 0
      %p95 = por %p93, %p94
      %s97 = sadd.s32 %s96, 1
      %p100 = scmp.eq.s32.totalorder %s22, 1
      %p101 = scmp.ne.s32.totalorder %s96, %s98
      %p102 = scmp.eq.s32.totalorder %s22, 0
      %p103 = por %p101, %p102
      %p104 = scmp.ne.s32.totalorder %s96, %s98
      %p105 = scmp.eq.s32.totalorder %s27, 1
      %p106 = por %p104, %p105
      %p107 = scmp.ne.s32.totalorder %s98, %s99
      %p108 = scmp.eq.s32.totalorder %s27, 0
      %p109 = por %p107, %p108
      %p110 = scmp.ne.s32.totalorder %s98, %s99
      %p111 = scmp.eq.s32.totalorder %s28, 1
      %p112 = por %p110, %p111
      %p114 = scmp.ne.s32.totalorder %s99, %s113
      %p115 = scmp.eq.s32.totalorder %s28, 0
      %p116 = por %p114, %p115
      %s118 = sadd.s32 %s117, 1
      %p121 = scmp.eq.s32.totalorder %s22, 1
      %p122 = scmp.ne.s32.totalorder %s117, %s119
      %p123 = scmp.eq.s32.totalorder %s22, 0
      %p124 = por %p122, %p123
      %p125 = scmp.ne.s32.totalorder %s117, %s119
      %p126 = scmp.eq.s32.totalorder %s27, 1
      %p127 = por %p125, %p126
      %p128 = scmp.ne.s32.totalorder %s119, %s120
      %p129 = scmp.eq.s32.totalorder %s27, 0
      %p130 = por %p128, %p129
      %p131 = scmp.ne.s32.totalorder %s119, %s120
      %p132 = scmp.eq.s32.totalorder %s28, 1
      %p133 = por %p131, %p132
      %p135 = scmp.ne.s32.totalorder %s120, %s134
      %p136 = scmp.eq.s32.totalorder %s28, 0
      %p137 = por %p135, %p136
      %s139 = sadd.s32 %s138, 1
      %p142 = scmp.eq.s32.totalorder %s22, 1
      %p143 = scmp.ne.s32.totalorder %s138, %s140
      %p144 = scmp.eq.s32.totalorder %s22, 0
      %p145 = por %p143, %p144
      %p146 = scmp.ne.s32.totalorder %s138, %s140
      %p147 = scmp.eq.s32.totalorder %s27, 1
      %p148 = por %p146, %p147
      %p149 = scmp.ne.s32.totalorder %s140, %s141
      %p150 = scmp.eq.s32.totalorder %s27, 0
      %p151 = por %p149, %p150
      %p152 = scmp.ne.s32.totalorder %s140, %s141
      %p153 = scmp.eq.s32.totalorder %s28, 1
      %p154 = por %p152, %p153
      %p156 = scmp.ne.s32.totalorder %s141, %s155
      %p157 = scmp.eq.s32.totalorder %s28, 0
      %p158 = por %p156, %p157
      %s160 = sadd.s32 %s159, 1
      %p163 = scmp.eq.s32.totalorder %s22, 1
      %p164 = scmp.ne.s32.totalorder %s159, %s161
      %p165 = scmp.eq.s32.totalorder %s22, 0
      %p166 = por %p164, %p165
      %p167 = scmp.ne.s32.totalorder %s159, %s161
      %p168 = scmp.eq.s32.totalorder %s27, 1
      %p169 = por %p167, %p168
      %p170 = scmp.ne.s32.totalorder %s161, %s162
      %p171 = scmp.eq.s32.totalorder %s27, 0
      %p172 = por %p170, %p171
      %p173 = scmp.ne.s32.totalorder %s161, %s162
      %p174 = scmp.eq.s32.totalorder %s28, 1
      %p175 = por %p173, %p174
      %p177 = scmp.ne.s32.totalorder %s162, %s176
      %p178 = scmp.eq.s32.totalorder %s28, 0
      %p179 = por %p177, %p178
      %s180 = ssub.s32 %s29, %s41
      %s181 = ssub.s32 %s30, %s37
      %s182 = sor.u32 %s180, %s181
      %p183 = scmp.eq.s32.totalorder %s182, 0
      %s185 = sadd.s32 %s184, 1
      %s186 = scalar_select %p183, %s184, %s185
      %p189 = pneg %p183
      %p190 = scmp.eq.s32.totalorder %s22, 1
      %p191 = por %p189, %p190
      %p192 = scmp.ne.s32.totalorder %s184, %s187
      %p193 = scmp.eq.s32.totalorder %s22, 0
      %p194 = por %p192, %p193
      %p195 = scmp.ne.s32.totalorder %s184, %s187
      %p196 = scmp.eq.s32.totalorder %s27, 1
      %p197 = por %p195, %p196
      %p198 = scmp.ne.s32.totalorder %s187, %s188
      %p199 = scmp.eq.s32.totalorder %s27, 0
      %p200 = por %p198, %p199
      %p201 = scmp.ne.s32.totalorder %s187, %s188
      %p202 = scmp.eq.s32.totalorder %s28, 1
      %p203 = por %p201, %p202
      %p205 = scmp.ne.s32.totalorder %s188, %s204
      %p206 = scmp.eq.s32.totalorder %s28, 0
      %p207 = por %p205, %p206
      %p208 = scmp.le.s32.totalorder 1, %s22
      %p209 = scmp.lt.s32.totalorder %s22, 3
      %p210 = pnand %p208, %p209
      %p211 = pneg %p210
      // Predicated region
      $region9: #{tpu_custom_call.1} parent=5 // pred_check
        _
      $region10: #{tpu_custom_call.1} parent=5 // pred_check_branch
        %213 = sbr.rel (%p210) target = $region12
      $region11: #{tpu_custom_call.1} parent=5 // pred_region
        %s214 = ssub.s32 %s22, 1
        // Predicated region
        $region13: #{tpu_custom_call.1} parent=11 // pred_check
          %p215 = pneg %p109
        $region14: #{tpu_custom_call.1} parent=11 // pred_check_branch
          %217 = sbr.rel (%p215) target = $region16
        $region15: #{tpu_custom_call.1} parent=11 // pred_region
          %219 = vsyncadd [#allocation6], 0
          %s220 = sshll.u32 %s2, 4
          %s221 = int_to_ptr.hbm [resolvable:$true] %s220
          %s222 = sshll.u32 [#allocation7], 4
          %s223 = int_to_ptr.vmem [resolvable:$true] %s222
          %228 = dma.hbm_to_vmem [thread:$0]  %s221, 512, %s223, [#allocation6], 128, 128, 8
        $region16: #{tpu_custom_call.1} parent=11 // pred_fallthru
          _
        // Predicated region
        $region17: #{tpu_custom_call.1} parent=11 // pred_check
          %p229 = pneg %p130
        $region18: #{tpu_custom_call.1} parent=11 // pred_check_branch
          %231 = sbr.rel (%p229) target = $region20
        $region19: #{tpu_custom_call.1} parent=11 // pred_region
          %233 = vsyncadd [#allocation9], 0
          %s234 = sshll.u32 %s3, 4
          %s235 = int_to_ptr.hbm [resolvable:$true] %s234
          %s236 = sshll.u32 [#allocation8], 4
          %s237 = int_to_ptr.vmem [resolvable:$true] %s236
          %242 = dma.hbm_to_vmem [thread:$0]  %s235, 512, %s237, [#allocation9], 128, 128, 8
        $region20: #{tpu_custom_call.1} parent=11 // pred_fallthru
          _
        // Predicated region
        $region21: #{tpu_custom_call.1} parent=11 // pred_check
          %p243 = pneg %p151
        $region22: #{tpu_custom_call.1} parent=11 // pred_check_branch
          %245 = sbr.rel (%p243) target = $region24
        $region23: #{tpu_custom_call.1} parent=11 // pred_region
          %247 = vsyncadd [#allocation9], 0
          %s249 = sshll.u32 %s4, 4
          %s250 = int_to_ptr.hbm [resolvable:$true] %s249
          %s251 = sshll.u32 [#allocation10], 4
          %s252 = int_to_ptr.vmem [resolvable:$true] %s251
          %254 = dma.hbm_to_vmem [thread:$0]  %s250, 16, %s252, [#allocation9]
        $region24: #{tpu_custom_call.1} parent=11 // pred_fallthru
          _
        // Predicated region
        $region25: #{tpu_custom_call.1} parent=11 // pred_check
          %p255 = pneg %p172
        $region26: #{tpu_custom_call.1} parent=11 // pred_check_branch
          %257 = sbr.rel (%p255) target = $region28
        $region27: #{tpu_custom_call.1} parent=11 // pred_region
          _
        $region28: #{tpu_custom_call.1} parent=11 // pred_fallthru
          _
      $region12: #{tpu_custom_call.1} parent=5 // pred_fallthru
        _
      %p258 = scmp.lt.s32.totalorder %s22, 2
      // Predicated region
      $region29: #{tpu_custom_call.1} parent=5 // pred_check
        %p259 = pneg %p258
      $region30: #{tpu_custom_call.1} parent=5 // pred_check_branch
        %261 = sbr.rel (%p259) target = $region32
      $region31: #{tpu_custom_call.1} parent=5 // pred_region
        // Predicated region
        $region33: #{tpu_custom_call.1} parent=31 // pred_check
          %p262 = pneg %p56
        $region34: #{tpu_custom_call.1} parent=31 // pred_check_branch
          %264 = sbr.rel (%p262) target = $region36
        $region35: #{tpu_custom_call.1} parent=31 // pred_region
          %s265 = sand.u32 %s46, 1
          %s266 = scalar_lea.sflag [#allocation3], %s265
          %s267 = sand.u32 %s46, 1
          %s268 = smul.addr %s267, 8
          %s269 = scalar_lea.vmem [#allocation2], %s268
          %271 = vsyncadd %s266, 0
          %s272 = sadd.s32 %s30, %s29
          %s273 = smul.addr %s272, 8
          %s274 = scalar_lea.hbm %s0, %s273
          %s276 = sshll.u32 %s274, 4
          %s277 = int_to_ptr.hbm [resolvable:$true] %s276
          %s278 = sshll.u32 %s269, 4
          %s279 = int_to_ptr.vmem [resolvable:$true] %s278
          %281 = dma.hbm_to_vmem [thread:$0]  %s277, 128, %s279, %s266
        $region36: #{tpu_custom_call.1} parent=31 // pred_fallthru
          _
        // Predicated region
        $region37: #{tpu_custom_call.1} parent=31 // pred_check
          %p282 = pneg %p82
        $region38: #{tpu_custom_call.1} parent=31 // pred_check_branch
          %284 = sbr.rel (%p282) target = $region40
        $region39: #{tpu_custom_call.1} parent=31 // pred_region
          %s285 = sand.u32 %s22, 1
          %s286 = scalar_lea.sflag [#allocation6], %s285
          %s287 = sand.u32 %s72, 1
          %s288 = smul.addr %s287, 8
          %s289 = scalar_lea.vmem [#allocation5], %s288
          %291 = vsyncadd %s286, 0
          %s292 = smul.addr %s29, 8
          %s293 = scalar_lea.hbm %s1, %s292
          %s295 = sshll.u32 %s293, 4
          %s296 = int_to_ptr.hbm [resolvable:$true] %s295
          %s297 = sshll.u32 %s289, 4
          %s298 = int_to_ptr.vmem [resolvable:$true] %s297
          %300 = dma.hbm_to_vmem [thread:$0]  %s296, 128, %s298, %s286
        $region40: #{tpu_custom_call.1} parent=31 // pred_fallthru
          _
      $region32: #{tpu_custom_call.1} parent=5 // pred_fallthru
        _
      %p301 = scmp.le.s32.totalorder 1, %s22
      %p302 = scmp.lt.s32.totalorder %s22, 3
      %p303 = pnand %p301, %p302
      %p304 = pneg %p303
      // Predicated region
      $region41: #{tpu_custom_call.1} parent=5 // pred_check
        _
      $region42: #{tpu_custom_call.1} parent=5 // pred_check_branch
        %306 = sbr.rel (%p303) target = $region44
      $region43: #{tpu_custom_call.1} parent=5 // pred_region
        %s307 = ssub.s32 %s22, 1
        %s308 = sand.u32 %s49, 1
        %s309 = scalar_lea.sflag [#allocation3], %s308
        %s310 = sand.u32 %s49, 1
        %s311 = smul.addr %s310, 8
        %s312 = scalar_lea.vmem [#allocation2], %s311
        // Predicated region
        $region45: #{tpu_custom_call.1} parent=43 // pred_check
          %p313 = pneg %p62
        $region46: #{tpu_custom_call.1} parent=43 // pred_check_branch
          %315 = sbr.rel (%p313) target = $region48
        $region47: #{tpu_custom_call.1} parent=43 // pred_region
          %317 = dma.done %s309, 128
        $region48: #{tpu_custom_call.1} parent=43 // pred_fallthru
          _
        %s318 = sand.u32 %s27, 1
        %s319 = scalar_lea.sflag [#allocation6], %s318
        %s320 = sand.u32 %s75, 1
        %s321 = smul.addr %s320, 8
        %s322 = scalar_lea.vmem [#allocation5], %s321
        // Predicated region
        $region49: #{tpu_custom_call.1} parent=43 // pred_check
          %p323 = pneg %p88
        $region50: #{tpu_custom_call.1} parent=43 // pred_check_branch
          %325 = sbr.rel (%p323) target = $region52
        $region51: #{tpu_custom_call.1} parent=43 // pred_region
          %327 = dma.done %s319, 128
        $region52: #{tpu_custom_call.1} parent=43 // pred_fallthru
          _
        // Predicated region
        $region53: #{tpu_custom_call.1} parent=43 // pred_check
          %p328 = pneg %p109
        $region54: #{tpu_custom_call.1} parent=43 // pred_check_branch
          %330 = sbr.rel (%p328) target = $region56
        $region55: #{tpu_custom_call.1} parent=43 // pred_region
          %332 = dma.done [#allocation6], 512
        $region56: #{tpu_custom_call.1} parent=43 // pred_fallthru
          _
        // Predicated region
        $region57: #{tpu_custom_call.1} parent=43 // pred_check
          %p333 = pneg %p130
        $region58: #{tpu_custom_call.1} parent=43 // pred_check_branch
          %335 = sbr.rel (%p333) target = $region60
        $region59: #{tpu_custom_call.1} parent=43 // pred_region
          %337 = dma.done [#allocation9], 512
        $region60: #{tpu_custom_call.1} parent=43 // pred_fallthru
          _
        // Predicated region
        $region61: #{tpu_custom_call.1} parent=43 // pred_check
          %p338 = pneg %p151
        $region62: #{tpu_custom_call.1} parent=43 // pred_check_branch
          %340 = sbr.rel (%p338) target = $region64
        $region63: #{tpu_custom_call.1} parent=43 // pred_region
          %342 = dma.done [#allocation9], 16
        $region64: #{tpu_custom_call.1} parent=43 // pred_fallthru
          _
        %s343 = sand.u32 %s49, 1
        %s344 = scalar_lea.sflag [#allocation3], %s343
        %s345 = sand.u32 %s49, 1
        %s346 = smul.addr %s345, 8
        %s347 = scalar_lea.vmem [#allocation2], %s346
        %p348 = pneg %p62
        %p349 = pneg %p59
        %s350 = sand.u32 %s27, 1
        %s351 = scalar_lea.sflag [#allocation6], %s350
        %s352 = sand.u32 %s75, 1
        %s353 = smul.addr %s352, 8
        %s354 = scalar_lea.vmem [#allocation5], %s353
        %p355 = pneg %p88
        %p356 = pneg %p85
        %p357 = pneg %p109
        %p358 = pneg %p106
        %p359 = pneg %p130
        %p360 = pneg %p127
        %p361 = pneg %p151
        %p362 = pneg %p148
        %p363 = pneg %p172
        %p364 = pneg %p169
        %p365 = pneg %p200
        %p366 = pneg %p197
        %s367 = sand.u32 %s187, 1
        %s368 = scalar_lea.sflag [#allocation4], %s367
        %s369 = sand.u32 %s187, 1
        %s370 = smul.addr %s369, 8
        %s371 = scalar_lea.vmem [#allocation11], %s370
        %v372 = vld [vmem:[%s312] sm:$0xff]
        %v373 = vld [vmem:[%s322] sm:$0xff]
        %v374 = vld [vmem:[#allocation10] sm:$0x1]
        %v375 = vld [vmem:[%s5] sm:$0x7]
        %v376 = vld [vmem:[#allocation7] sm:$0xff]
        %v377 = vld [vmem:[#allocation7 + $0x8] sm:$0xff]
        %v378 = vld [vmem:[#allocation7 + $0x10] sm:$0xff]
        %v379 = vld [vmem:[#allocation7 + $0x18] sm:$0xff]
        %v381 = vperm.slane %v374, 0
        %vm383 = vcmask 261120
        %v385 = vsel %vm383, %v372, 0
        %387 = vmatpush.msra.mxu0 0.0
        %388 = vmatpush.msra.mxu0 0.0
        %389 = vmatpush.msra.mxu0 0.0
        %390 = vmatpush.msra.mxu0 0.0
        %391 = vmatpush.msra.mxu0 0.0
        %392 = vmatpush.msra.mxu0 0.0
        %393 = vmatpush.msra.mxu0 0.0
        %394 = vmatpush.msra.mxu0 0.0
        %395 = vmatpush.msra.mxu0 0.0
        %396 = vmatpush.msra.mxu0 0.0
        %397 = vmatpush.msra.mxu0 0.0
        %398 = vmatpush.msra.mxu0 0.0
        %399 = vmatpush.msra.mxu0 %v379
        %400 = vmatpush.msra.mxu0 %v378
        %401 = vmatpush.msra.mxu0 %v377
        %402 = vmatpush.msra.mxu0 %v376
        %403 = vmatmul.f32.gmra.mxu0 %v385
        %v404 = vpop.f32.mrf.mxu0
        %v405 = vadd.f32 %v381, %v404
        %406 = vdwg.mxu0
        %411 = vrot.lane.b32.xlu0 %v376, 96
        %v412 = vpop.permute.xlu0 %411
        %413 = vrot.lane.b32.xlu0 %v377, 96
        %v414 = vpop.permute.xlu0 %413
        %415 = vrot.lane.b32.xlu0 %v378, 96
        %v416 = vpop.permute.xlu0 %415
        %417 = vrot.lane.b32.xlu0 %v379, 96
        %v418 = vpop.permute.xlu0 %417
        %423 = vrot.lane.b32.xlu0 %v381, 96
        %v424 = vpop.permute.xlu0 %423
        %v427 = vsel %vm383, %v373, 0
        %429 = vmatpush.msra.mxu0 0.0
        %430 = vmatpush.msra.mxu0 0.0
        %431 = vmatpush.msra.mxu0 0.0
        %432 = vmatpush.msra.mxu0 0.0
        %433 = vmatpush.msra.mxu0 0.0
        %434 = vmatpush.msra.mxu0 0.0
        %435 = vmatpush.msra.mxu0 0.0
        %436 = vmatpush.msra.mxu0 0.0
        %437 = vmatpush.msra.mxu0 0.0
        %438 = vmatpush.msra.mxu0 0.0
        %439 = vmatpush.msra.mxu0 0.0
        %440 = vmatpush.msra.mxu0 0.0
        %441 = vmatpush.msra.mxu0 %v418
        %442 = vmatpush.msra.mxu0 %v416
        %443 = vmatpush.msra.mxu0 %v414
        %444 = vmatpush.msra.mxu0 %v412
        %445 = vmatmul.f32.gmra.mxu0 %v427
        %v446 = vpop.f32.mrf.mxu0
        %v447 = vadd.f32 %v424, %v446
        %448 = vdwg.mxu0
        %v450 = vsel %vm383, %v405, 0
        %v453 = vsel %vm383, %v447, 0
        %455 = vmatpush.xpose.msra.mxu0 0.0
        %456 = vmatpush.xpose.msra.mxu0 0.0
        %457 = vmatpush.xpose.msra.mxu0 0.0
        %458 = vmatpush.xpose.msra.mxu0 0.0
        %459 = vmatpush.xpose.msra.mxu0 0.0
        %460 = vmatpush.xpose.msra.mxu0 0.0
        %461 = vmatpush.xpose.msra.mxu0 0.0
        %462 = vmatpush.xpose.msra.mxu0 0.0
        %463 = vmatpush.xpose.msra.mxu0 0.0
        %464 = vmatpush.xpose.msra.mxu0 0.0
        %465 = vmatpush.xpose.msra.mxu0 0.0
        %466 = vmatpush.xpose.msra.mxu0 0.0
        %467 = vmatpush.xpose.msra.mxu0 0.0
        %468 = vmatpush.xpose.msra.mxu0 0.0
        %469 = vmatpush.xpose.msra.mxu0 0.0
        %470 = vmatpush.xpose.msra.mxu0 %v453
        %471 = vmatmul.f32.gmra.mxu0 %v450
        %v472 = vpop.f32.mrf.mxu0
        %v473 = vadd.f32 0.0, %v472
        %474 = vdwg.mxu0
        %vm475 = vcmask 64512
        %v476 = vsel %vm475, %v473, -inf
        %477 = vmax.xlane.f32.xlu0 %v476
        %v478 = vpop.xlane.xlu0 %477
        %v479 = vsub.f32 %v473, %v478
        %v480 = vmul.f32 %v479, 1.442695
        %v481 = vpow.pop %v480
        %v482 = vsel %vm475, %v481, 0.0
        %483 = vadd.xlane.f32.xlu0 %v482
        %v484 = vpop.xlane.xlu0 %483
        %v485 = vrcp.pop %v484
        %v486 = vmul.f32 %v484, %v485
        %v487 = vsub.f32 1.0, %v486
        %v488 = vmul.f32 %v485, %v487
        %v489 = vadd.f32 %v485, %v488
        %vm490 = vweird.f32 %v484
        %vm491 = vweird.f32 %v485
        %vm492 = vmor %vm490, %vm491
        %v493 = vsel %vm492, %v485, %v489
        %v494 = vand.u32 2147483647, %v484
        %vm495 = vcmp.eq.f32.partialorder %v494, 8.507059e+37
        %v496 = vand.u32 %v484, 2147483648
        %v497 = vor.u32 1.1754944e-38, %v496
        %v498 = vsel %vm495, %v497, %v493
        %v499 = vmul.f32 %v481, %v498
        %500 = vrot.lane.b32.xlu0 %v447, 96
        %v501 = vpop.permute.xlu0 %500
        %v504 = vsel %vm475, %v499, 0
        %506 = vmatpush.msra.mxu0 0.0
        %507 = vmatpush.msra.mxu0 0.0
        %508 = vmatpush.msra.mxu0 0.0
        %509 = vmatpush.msra.mxu0 0.0
        %510 = vmatpush.msra.mxu0 0.0
        %511 = vmatpush.msra.mxu0 0.0
        %512 = vmatpush.msra.mxu0 0.0
        %513 = vmatpush.msra.mxu0 0.0
        %514 = vmatpush.msra.mxu0 0.0
        %515 = vmatpush.msra.mxu0 0.0
        %516 = vmatpush.msra.mxu0 0.0
        %517 = vmatpush.msra.mxu0 0.0
        %518 = vmatpush.msra.mxu0 0.0
        %519 = vmatpush.msra.mxu0 0.0
        %520 = vmatpush.msra.mxu0 0.0
        %521 = vmatpush.msra.mxu0 %v501
        %522 = vmatmul.f32.gmra.mxu0 %v504
        %v523 = vpop.f32.mrf.mxu0
        %v524 = vadd.f32 0.0, %v523
        %525 = vdwg.mxu0
        %v526 = vld [vmem:[#allocation8] sm:$0xff]
        %v527 = vld [vmem:[#allocation8 + $0x8] sm:$0xff]
        %v528 = vld [vmem:[#allocation8 + $0x10] sm:$0xff]
        %v529 = vld [vmem:[#allocation8 + $0x18] sm:$0xff]
        %v530 = vperm.slane %v375, 0
        %v532 = vsel %vm383, %v524, 0
        %534 = vmatpush.msra.mxu0 0.0
        %535 = vmatpush.msra.mxu0 0.0
        %536 = vmatpush.msra.mxu0 0.0
        %537 = vmatpush.msra.mxu0 0.0
        %538 = vmatpush.msra.mxu0 0.0
        %539 = vmatpush.msra.mxu0 0.0
        %540 = vmatpush.msra.mxu0 0.0
        %541 = vmatpush.msra.mxu0 0.0
        %542 = vmatpush.msra.mxu0 0.0
        %543 = vmatpush.msra.mxu0 0.0
        %544 = vmatpush.msra.mxu0 0.0
        %545 = vmatpush.msra.mxu0 0.0
        %546 = vmatpush.msra.mxu0 %v529
        %547 = vmatpush.msra.mxu0 %v528
        %548 = vmatpush.msra.mxu0 %v527
        %549 = vmatpush.msra.mxu0 %v526
        %550 = vmatmul.f32.gmra.mxu0 %v532
        %v551 = vpop.f32.mrf.mxu0
        %v552 = vadd.f32 %v530, %v551
        %553 = vdwg.mxu0
        %v554 = vadd.f32 %v552, %v372
        %v555 = vsel %vm383, %v554, 0.0
        %556 = vadd.xlane.f32.xlu0 %v555
        %v557 = vpop.xlane.xlu0 %556
        %v558 = vrcp.pop 32.0
        %v559 = vmul.f32 32.0, %v558
        %v560 = vsub.f32 1.0, %v559
        %v561 = vmul.f32 %v558, %v560
        %v562 = vadd.f32 %v558, %v561
        %vm563 = vweird.f32 %v558
        %v564 = vsel %vm563, %v558, %v562
        %v565 = vmul.f32 %v557, %v564
        %v566 = vsub.f32 %v554, %v565
        %v567 = vmul.f32 %v566, %v566
        %v568 = vsel %vm383, %v567, 0.0
        %569 = vadd.xlane.f32.xlu0 %v568
        %v570 = vpop.xlane.xlu0 %569
        %v571 = vmul.f32 %v570, %v564
        %v572 = vadd.f32 %v571, 1e-05
        %v573 = vrsqrt.pop %v572
        %v574 = vmul.f32 %v573, %v572
        %v575 = vmul.f32 %v574, %v573
        %v576 = vmul.f32 0.5, %v575
        %v577 = vsub.f32 1.5, %v576
        %v578 = vmul.f32 %v573, %v577
        %vm579 = vweird.f32 %v572
        %vm580 = vweird.f32 %v573
        %vm581 = vmor %vm579, %vm580
        %v582 = vsel %vm581, %v573, %v578
        %v583 = vmul.f32 %v566, %v582
        %v584 = vperm.slane %v375, 1
        %v585 = vmul.f32 %v583, %v584
        %v586 = vperm.slane %v375, 2
        %v587 = vadd.f32 %v585, %v586
        %588 = vst.msk [vmem:[%s371] sm:$0xff] %vm383, %v587
        %s589 = sand.u32 %s187, 1
        %s590 = scalar_lea.sflag [#allocation4], %s589
        %s591 = sand.u32 %s187, 1
        %s592 = smul.addr %s591, 8
        %s593 = scalar_lea.vmem [#allocation11], %s592
        // Predicated region
        $region65: #{tpu_custom_call.1} parent=43 // pred_check
          %p594 = pneg %p197
        $region66: #{tpu_custom_call.1} parent=43 // pred_check_branch
          %596 = sbr.rel (%p594) target = $region68
        $region67: #{tpu_custom_call.1} parent=43 // pred_region
          %598 = vsyncadd %s590, 0
          %s599 = sadd.s32 %s32, %s31
          %s600 = smul.addr %s599, 8
          %s601 = scalar_lea.hbm %s6, %s600
          %s603 = sshll.u32 %s593, 4
          %s604 = int_to_ptr.vmem [resolvable:$true] %s603
          %s605 = sshll.u32 %s601, 4
          %s606 = int_to_ptr.hbm [resolvable:$true] %s605
          %608 = dma.vmem_to_hbm [thread:$0]  %s604, 128, %s606, %s590
        $region68: #{tpu_custom_call.1} parent=43 // pred_fallthru
          _
      $region44: #{tpu_custom_call.1} parent=5 // pred_fallthru
        _
      %p609 = scmp.le.s32.totalorder 2, %s22
      // Predicated region
      $region69: #{tpu_custom_call.1} parent=5 // pred_check
        %p610 = pneg %p609
      $region70: #{tpu_custom_call.1} parent=5 // pred_check_branch
        %612 = sbr.rel (%p610) target = $region72
      $region71: #{tpu_custom_call.1} parent=5 // pred_region
        %s613 = ssub.s32 %s22, 2
        // Predicated region
        $region73: #{tpu_custom_call.1} parent=71 // pred_check
          %p614 = pneg %p203
        $region74: #{tpu_custom_call.1} parent=71 // pred_check_branch
          %616 = sbr.rel (%p614) target = $region76
        $region75: #{tpu_custom_call.1} parent=71 // pred_region
          %s617 = sand.u32 %s188, 1
          %s618 = scalar_lea.sflag [#allocation4], %s617
          %s619 = sand.u32 %s188, 1
          %s620 = smul.addr %s619, 8
          %s621 = scalar_lea.vmem [#allocation11], %s620
          %623 = dma.done %s618, 128
        $region76: #{tpu_custom_call.1} parent=71 // pred_fallthru
          _
      $region72: #{tpu_custom_call.1} parent=5 // pred_fallthru
        _
    $region6: #{tpu_custom_call.1} parent=1 // loop_footer
      %s26 = sadd.s32 1, %s22
    $region7: #{tpu_custom_call.1} parent=1 // loop_footer_branch
      %21 = sbr.rel target = $region3
    $region8: #{tpu_custom_call.1} parent=1 // loop_exit
      _
    %624 = vsyncpa [#allocation3], 1
    %s625 = scalar_lea.sflag [#allocation3], 1
    %626 = vsyncpa %s625, 1
    %627 = vsyncpa [#allocation6], 1
    %s628 = scalar_lea.sflag [#allocation6], 1
    %629 = vsyncpa %s628, 1
    %630 = vsyncpa [#allocation9], 1
    %631 = vsyncpa [#allocation4], 1
    %s632 = scalar_lea.sflag [#allocation4], 1
    %633 = vsyncpa %s632, 1

</llo_original>
